<compile_context>
chip_gen: v6e
topology: v6e:2x2x1
jax: 0.10.0
libtpu: 0.0.40
codegen_flags: <defaults>
</compile_context>

<pallas_src>
import functools

import jax
import jax.numpy as jnp
import numpy as np
from jax import lax
from jax.experimental import pallas as pl
from jax.experimental.pallas import tpu as pltpu

LANE = 128  # TPU lane width; feature axes are padded to this inside the kernel


def _round_up(n, m):
    return ((n + m - 1) // m) * m


# ----------------------------------------------------------------------------
# Fused forward kernel
# ----------------------------------------------------------------------------
def _fused_forward_kernel(
    x_ref,      # (B, F)                 predictor input
    wp_ref,     # (F, P_pad)             predictor weight (zero-padded cols >= P)
    bp_ref,     # (1, P_pad)             predictor bias   (-1e30 in padded cols)
    wproj_ref,  # (P_pad, NA*Dm_pad)     LIVE (path, slot) projection weights
    bproj_ref,  # (1, NP*Dm_pad)         per-path projection biases (zero-padded)
    w2_ref,     # (NP*Dm_pad, P_pad)     final projection weight (zero-padded)
    b2_ref,     # (1, P_pad)             final projection bias (zero-padded)
    o_ref,      # (B, P_pad)             output (real phases in cols < P)
    *,
    active_slots,   # static tuple of (path_index, shift_k), one per wproj block
    num_path,       # static int
    dm_pad,         # static int (dmodel padded to LANE)
):
    B = x_ref.shape[0]

    # ---- predictor linear + softmax over the (padded) phase lanes -----------
    z = jnp.dot(x_ref[...], wp_ref[...], preferred_element_type=jnp.float32)
    z = z + bp_ref[...]                                   # pad lanes -> -1e30
    z = z - jnp.max(z, axis=-1, keepdims=True)
    e = jnp.exp(z)
    inv = pl.reciprocal(jnp.sum(e, axis=-1, keepdims=True), approx=True)
    probs = e * inv                                       # (B, P_pad), pads == 0

    # ---- every live (path, stack-slot) projection as ONE MXU matmul ---------
    a = jnp.dot(probs, wproj_ref[...], preferred_element_type=jnp.float32)
    # a: (B, NA * dm_pad), lane-aligned 128-wide block per live (path, slot)

    row = lax.broadcasted_iota(jnp.int32, (B, dm_pad), 0)

    parts = [None] * num_path
    for idx, (p, k) in enumerate(active_slots):
        if k != 0 and abs(k) >= B:
            # torch.roll + edge zeroing wipes the whole block in this case.
            continue
        col = idx * dm_pad
        blk = a[:, col:col + dm_pad]                      # static, lane-aligned
        if k == 0:
            contrib = blk
        else:
            rolled = pltpu.roll(blk, shift=k % B, axis=0)  # sublane rotate (XLU)
            keep = (row >= k) if k > 0 else (row < B + k)
            contrib = jnp.where(keep, rolled, 0.0)
        parts[p] = contrib if parts[p] is None else parts[p] + contrib

    for p in range(num_path):                              # safety; never hit
        if parts[p] is None:
            parts[p] = jnp.zeros((B, dm_pad), jnp.float32)

    # ---- concat paths, bias + ReLU, single combined final projection --------
    h = jnp.concatenate(parts, axis=-1)                    # (B, NP*dm_pad)
    h = jnp.maximum(h + bproj_ref[...], 0.0)
    out = jnp.dot(h, w2_ref[...], preferred_element_type=jnp.float32)
    o_ref[...] = (out + b2_ref[...]).astype(o_ref.dtype)


# ----------------------------------------------------------------------------
# Wrapper: lane-pad / rearrange weights once, then a single pallas_call
# ----------------------------------------------------------------------------
def prepare_params(params, stack_length, rolls):
    NP = len(rolls)
    F, P = params["wp"].shape
    dmodel = params["w_proj"].shape[2]
    P_pad = _round_up(P, LANE)
    Dm_pad = _round_up(dmodel, LANE)
    SL = stack_length

    wp = jnp.zeros((F, P_pad), jnp.float32).at[:, :P].set(params["wp"])
    bp = jnp.full((1, P_pad), -1e30, jnp.float32).at[:, :P].set(
        params["bp"].reshape(1, P))

    # Column-block layout of stacked projection weights, pruning slots that are
    # identically zero regardless of batch size (r == 0 and s > 0: torch zeroes
    # the whole shifted block).  Column block `idx` holds W_{p,s} for
    # active_slots[idx] = (p, k=s*r).
    w_proj = params["w_proj"].reshape(NP, SL, P, dmodel)
    active = []
    blocks = []
    for p in range(NP):
        r = int(rolls[p])
        for s in range(SL):
            if s > 0 and r == 0:
                continue
            blk = jnp.zeros((P_pad, Dm_pad), jnp.float32)
            blk = blk.at[:P, :dmodel].set(w_proj[p, s])
            blocks.append(blk)
            active.append((p, s * r))
    wproj_all = jnp.concatenate(blocks, axis=1)            # (P_pad, NA*Dm_pad)

    bproj = jnp.zeros((NP, Dm_pad), jnp.float32).at[:, :dmodel].set(
        params["b_proj"].reshape(NP, dmodel))
    bproj_all = bproj.reshape(1, NP * Dm_pad)

    w2 = jnp.zeros((NP, Dm_pad, P_pad), jnp.float32).at[:, :dmodel, :P].set(
        params["w2"])
    w2_all = w2.reshape(NP * Dm_pad, P_pad)
    b2 = jnp.zeros((1, P_pad), jnp.float32).at[:, :P].set(
        params["b2"].reshape(1, P))

    return dict(wp=wp, bp=bp, wproj=wproj_all, bproj=bproj_all,
                w2=w2_all, b2=b2, p_pad=P_pad, dm_pad=Dm_pad,
                num_surg_phase=P, num_path=NP,
                active_slots=tuple(active))


def forward(padded, x):
    B, F = x.shape
    NP = padded["num_path"]
    P_pad = padded["p_pad"]
    dm_pad = padded["dm_pad"]
    active = padded["active_slots"]
    K_all = len(active) * dm_pad
    H = NP * dm_pad

    kernel = functools.partial(
        _fused_forward_kernel,
        active_slots=active,
        num_path=int(NP),
        dm_pad=int(dm_pad),
    )

    out = pl.pallas_call(
        kernel,
        out_shape=jax.ShapeDtypeStruct((B, P_pad), jnp.float32),
        grid=(1,),
        in_specs=[
            pl.BlockSpec((B, F), lambda i: (0, 0)),
            pl.BlockSpec((F, P_pad), lambda i: (0, 0)),
            pl.BlockSpec((1, P_pad), lambda i: (0, 0)),
            pl.BlockSpec((P_pad, K_all), lambda i: (0, 0)),
            pl.BlockSpec((1, H), lambda i: (0, 0)),
            pl.BlockSpec((H, P_pad), lambda i: (0, 0)),
            pl.BlockSpec((1, P_pad), lambda i: (0, 0)),
        ],
        out_specs=pl.BlockSpec((B, P_pad), lambda i: (0, 0)),
        compiler_params=pltpu.CompilerParams(
            dimension_semantics=("arbitrary",)),
    )(x, padded["wp"], padded["bp"], padded["wproj"],
      padded["bproj"], padded["w2"], padded["b2"])

    return out[:, :padded["num_surg_phase"]]


# ----------------------------------------------------------------------------
# Pure-JAX reference (mirrors the PyTorch forward, including r == 0 behavior)
# ----------------------------------------------------------------------------
def _generate_stack_ref(x, stack_length, r):
    B = x.shape[0]
    stack_list = [x]
    for _ in range(stack_length - 1):
        shifted = jnp.roll(stack_list[-1], r, axis=0)
        if r > 0:
            shifted = shifted.at[:r].set(0.0)
        else:
            shifted = shifted.at[r:].set(0.0)   # r == 0 zeroes everything (torch)
        stack_list.append(shifted)
    stack = jnp.stack(stack_list, axis=0).transpose(1, 0, 2)
    return stack.reshape(B, -1)


def reference_forward(params, x, stack_length, rolls):
    z = x @ params["wp"] + params["bp"]
    probs = jax.nn.softmax(z, axis=-1)
    ys = []
    for i, r in enumerate(rolls):
        xx = _generate_stack_ref(probs, stack_length, int(r))
        ys.append(xx @ params["w_proj"][i] + params["b_proj"][i, 0])
    out = jnp.stack(ys, axis=0).transpose(1, 0, 2).reshape(x.shape[0], -1)
    out = jnp.maximum(out, 0.0)
    NP, dmodel, P = params["w2"].shape
    return out @ params["w2"].reshape(NP * dmodel, P) + params["b2"]


if __name__ == "__main__":
    # Small deterministic configuration (batch == time for the rolling stack)
    B = 8
    F_in = 16
    num_surg_phase = 7
    stack_length = 4
    rolls = [1, -1, 2, 0]          # includes r == 0 to exercise the edge case
    NP = len(rolls)
    dmodel = 32
    D1 = stack_length * num_surg_phase

    key = jax.random.PRNGKey(0)
    k = jax.random.split(key, 8)
    params = {
        "wp": jax.random.normal(k[0], (F_in, num_surg_phase), jnp.float32) * 0.2,
        "bp": jax.random.normal(k[1], (1, num_surg_phase), jnp.float32) * 0.1,
        "w_proj": jax.random.normal(k[2], (NP, D1, dmodel), jnp.float32) * 0.2,
        "b_proj": jax.random.normal(k[3], (NP, 1, dmodel), jnp.float32) * 0.1,
        "w2": jax.random.normal(k[4], (NP, dmodel, num_surg_phase), jnp.float32) * 0.2,
        "b2": jax.random.normal(k[5], (1, num_surg_phase), jnp.float32) * 0.1,
    }
    x = jax.random.normal(k[6], (B, F_in), jnp.float32)

    padded = prepare_params(params, stack_length, rolls)
    out = forward(padded, x)
    out = jax.block_until_ready(out)

    ref = reference_forward(params, x, stack_length, rolls)
    # approx reciprocal in the in-kernel softmax -> allow ~1e-3-level deviation
    np.testing.assert_allclose(np.asarray(out), np.asarray(ref),
                               rtol=2e-3, atol=2e-3)

    print("KERNEL_OK")
</pallas_src>

<mosaic_0001>
module attributes {stable_mosaic.version = 11 : i64} {
  func.func @_fused_forward_kernel(%arg0: i32, %arg1: memref<8x16xf32, #tpu.memory_space<vmem>>, %arg2: memref<16x128xf32, #tpu.memory_space<vmem>>, %arg3: memref<1x128xf32, #tpu.memory_space<vmem>>, %arg4: memref<128x1664xf32, #tpu.memory_space<vmem>>, %arg5: memref<1x512xf32, #tpu.memory_space<vmem>>, %arg6: memref<512x128xf32, #tpu.memory_space<vmem>>, %arg7: memref<1x128xf32, #tpu.memory_space<vmem>>, %arg8: memref<8x128xf32, #tpu.memory_space<vmem>>) attributes {dimension_semantics = [#tpu.dimension_semantics<arbitrary>], iteration_bounds = array<i64: 1>, scalar_prefetch = 0 : i64, scratch_operands = 0 : i64, tpu.core_type = #tpu.core_type<tc>, window_params = [{pipeline_mode = #tpu.pipeline_mode<synchronous>, transform_indices = @transform_0, window_bounds = array<i64: 8, 16>}, {pipeline_mode = #tpu.pipeline_mode<synchronous>, transform_indices = @transform_1, window_bounds = array<i64: 16, 128>}, {pipeline_mode = #tpu.pipeline_mode<synchronous>, transform_indices = @transform_2, window_bounds = array<i64: 1, 128>}, {pipeline_mode = #tpu.pipeline_mode<synchronous>, transform_indices = @transform_3, window_bounds = array<i64: 128, 1664>}, {pipeline_mode = #tpu.pipeline_mode<synchronous>, transform_indices = @transform_4, window_bounds = array<i64: 1, 512>}, {pipeline_mode = #tpu.pipeline_mode<synchronous>, transform_indices = @transform_5, window_bounds = array<i64: 512, 128>}, {pipeline_mode = #tpu.pipeline_mode<synchronous>, transform_indices = @transform_6, window_bounds = array<i64: 1, 128>}, {pipeline_mode = #tpu.pipeline_mode<synchronous>, transform_indices = @transform_7, window_bounds = array<i64: 8, 128>}]} {
    %c0 = arith.constant 0 : index
    %c0_0 = arith.constant 0 : index
    %0 = vector.load %arg1[%c0, %c0_0] : memref<8x16xf32, #tpu.memory_space<vmem>>, vector<8x16xf32>
    %c0_1 = arith.constant 0 : index
    %c0_2 = arith.constant 0 : index
    %1 = vector.load %arg2[%c0_1, %c0_2] : memref<16x128xf32, #tpu.memory_space<vmem>>, vector<16x128xf32>
    %cst = arith.constant dense<0.000000e+00> : vector<8x128xf32>
    %2 = tpu.matmul %0, %1, %cst {dimension_numbers = #tpu.dot_dimension_numbers<[1], [0], [0], [1], [0, 0, 1, 1], [], []>} : vector<8x16xf32>, vector<16x128xf32>, vector<8x128xf32> -> vector<8x128xf32>
    %c0_3 = arith.constant 0 : index
    %c0_4 = arith.constant 0 : index
    %3 = vector.load %arg3[%c0_3, %c0_4] : memref<1x128xf32, #tpu.memory_space<vmem>>, vector<1x128xf32>
    %4 = vector.broadcast %3 : vector<1x128xf32> to vector<8x128xf32>
    %5 = arith.addf %2, %4 : vector<8x128xf32>
    %cst_5 = arith.constant dense<0xFF800000> : vector<8xf32>
    %6 = vector.multi_reduction <maximumf>, %5, %cst_5 [1] : vector<8x128xf32> to vector<8xf32>
    %7 = vector.shape_cast %6 : vector<8xf32> to vector<8x1xf32>
    %8 = vector.broadcast %7 : vector<8x1xf32> to vector<8x128xf32>
    %9 = arith.subf %5, %8 : vector<8x128xf32>
    %10 = math.exp %9 : vector<8x128xf32>
    %cst_6 = arith.constant dense<0.000000e+00> : vector<8xf32>
    %11 = vector.multi_reduction <add>, %10, %cst_6 [1] : vector<8x128xf32> to vector<8xf32>
    %12 = vector.shape_cast %11 : vector<8xf32> to vector<8x1xf32>
    %13 = tpu.reciprocal %12 {approx = true} : vector<8x1xf32> -> vector<8x1xf32>
    %14 = vector.broadcast %13 : vector<8x1xf32> to vector<8x128xf32>
    %15 = arith.mulf %10, %14 : vector<8x128xf32>
    %c0_7 = arith.constant 0 : index
    %c0_8 = arith.constant 0 : index
    %16 = vector.load %arg4[%c0_7, %c0_8] : memref<128x1664xf32, #tpu.memory_space<vmem>>, vector<128x1664xf32>
    %cst_9 = arith.constant dense<0.000000e+00> : vector<8x1664xf32>
    %17 = tpu.matmul %15, %16, %cst_9 {dimension_numbers = #tpu.dot_dimension_numbers<[1], [0], [0], [1], [0, 0, 1, 1], [], []>} : vector<8x128xf32>, vector<128x1664xf32>, vector<8x1664xf32> -> vector<8x1664xf32>
    %18 = tpu.iota {dimensions = array<i32: 0>} : vector<8x128xi32>
    %19 = vector.extract_strided_slice %17 {offsets = [0, 0], sizes = [8, 128], strides = [1, 1]} : vector<8x1664xf32> to vector<8x128xf32>
    %20 = vector.extract_strided_slice %17 {offsets = [0, 128], sizes = [8, 128], strides = [1, 1]} : vector<8x1664xf32> to vector<8x128xf32>
    %c1_i32 = arith.constant 1 : i32
    %21 = tpu.dynamic_rotate %20 by %c1_i32 dim 0 : vector<8x128xf32>, i32 -> vector<8x128xf32>
    %c1_i32_10 = arith.constant 1 : i32
    %22 = vector.broadcast %c1_i32_10 : i32 to vector<8x128xi32>
    %23 = arith.cmpi sge, %18, %22 : vector<8x128xi32>
    %cst_11 = arith.constant 0.000000e+00 : f32
    %24 = vector.broadcast %cst_11 : f32 to vector<8x128xf32>
    %25 = arith.select %23, %21, %24 : vector<8x128xi1>, vector<8x128xf32>
    %26 = arith.addf %19, %25 : vector<8x128xf32>
    %27 = vector.extract_strided_slice %17 {offsets = [0, 256], sizes = [8, 128], strides = [1, 1]} : vector<8x1664xf32> to vector<8x128xf32>
    %c2_i32 = arith.constant 2 : i32
    %28 = tpu.dynamic_rotate %27 by %c2_i32 dim 0 : vector<8x128xf32>, i32 -> vector<8x128xf32>
    %c2_i32_12 = arith.constant 2 : i32
    %29 = vector.broadcast %c2_i32_12 : i32 to vector<8x128xi32>
    %30 = arith.cmpi sge, %18, %29 : vector<8x128xi32>
    %cst_13 = arith.constant 0.000000e+00 : f32
    %31 = vector.broadcast %cst_13 : f32 to vector<8x128xf32>
    %32 = arith.select %30, %28, %31 : vector<8x128xi1>, vector<8x128xf32>
    %33 = arith.addf %26, %32 : vector<8x128xf32>
    %34 = vector.extract_strided_slice %17 {offsets = [0, 384], sizes = [8, 128], strides = [1, 1]} : vector<8x1664xf32> to vector<8x128xf32>
    %c3_i32 = arith.constant 3 : i32
    %35 = tpu.dynamic_rotate %34 by %c3_i32 dim 0 : vector<8x128xf32>, i32 -> vector<8x128xf32>
    %c3_i32_14 = arith.constant 3 : i32
    %36 = vector.broadcast %c3_i32_14 : i32 to vector<8x128xi32>
    %37 = arith.cmpi sge, %18, %36 : vector<8x128xi32>
    %cst_15 = arith.constant 0.000000e+00 : f32
    %38 = vector.broadcast %cst_15 : f32 to vector<8x128xf32>
    %39 = arith.select %37, %35, %38 : vector<8x128xi1>, vector<8x128xf32>
    %40 = arith.addf %33, %39 : vector<8x128xf32>
    %41 = vector.extract_strided_slice %17 {offsets = [0, 512], sizes = [8, 128], strides = [1, 1]} : vector<8x1664xf32> to vector<8x128xf32>
    %42 = vector.extract_strided_slice %17 {offsets = [0, 640], sizes = [8, 128], strides = [1, 1]} : vector<8x1664xf32> to vector<8x128xf32>
    %c7_i32 = arith.constant 7 : i32
    %43 = tpu.dynamic_rotate %42 by %c7_i32 dim 0 : vector<8x128xf32>, i32 -> vector<8x128xf32>
    %c7_i32_16 = arith.constant 7 : i32
    %44 = vector.broadcast %c7_i32_16 : i32 to vector<8x128xi32>
    %45 = arith.cmpi slt, %18, %44 : vector<8x128xi32>
    %cst_17 = arith.constant 0.000000e+00 : f32
    %46 = vector.broadcast %cst_17 : f32 to vector<8x128xf32>
    %47 = arith.select %45, %43, %46 : vector<8x128xi1>, vector<8x128xf32>
    %48 = arith.addf %41, %47 : vector<8x128xf32>
    %49 = vector.extract_strided_slice %17 {offsets = [0, 768], sizes = [8, 128], strides = [1, 1]} : vector<8x1664xf32> to vector<8x128xf32>
    %c6_i32 = arith.constant 6 : i32
    %50 = tpu.dynamic_rotate %49 by %c6_i32 dim 0 : vector<8x128xf32>, i32 -> vector<8x128xf32>
    %c6_i32_18 = arith.constant 6 : i32
    %51 = vector.broadcast %c6_i32_18 : i32 to vector<8x128xi32>
    %52 = arith.cmpi slt, %18, %51 : vector<8x128xi32>
    %cst_19 = arith.constant 0.000000e+00 : f32
    %53 = vector.broadcast %cst_19 : f32 to vector<8x128xf32>
    %54 = arith.select %52, %50, %53 : vector<8x128xi1>, vector<8x128xf32>
    %55 = arith.addf %48, %54 : vector<8x128xf32>
    %56 = vector.extract_strided_slice %17 {offsets = [0, 896], sizes = [8, 128], strides = [1, 1]} : vector<8x1664xf32> to vector<8x128xf32>
    %c5_i32 = arith.constant 5 : i32
    %57 = tpu.dynamic_rotate %56 by %c5_i32 dim 0 : vector<8x128xf32>, i32 -> vector<8x128xf32>
    %c5_i32_20 = arith.constant 5 : i32
    %58 = vector.broadcast %c5_i32_20 : i32 to vector<8x128xi32>
    %59 = arith.cmpi slt, %18, %58 : vector<8x128xi32>
    %cst_21 = arith.constant 0.000000e+00 : f32
    %60 = vector.broadcast %cst_21 : f32 to vector<8x128xf32>
    %61 = arith.select %59, %57, %60 : vector<8x128xi1>, vector<8x128xf32>
    %62 = arith.addf %55, %61 : vector<8x128xf32>
    %63 = vector.extract_strided_slice %17 {offsets = [0, 1024], sizes = [8, 128], strides = [1, 1]} : vector<8x1664xf32> to vector<8x128xf32>
    %64 = vector.extract_strided_slice %17 {offsets = [0, 1152], sizes = [8, 128], strides = [1, 1]} : vector<8x1664xf32> to vector<8x128xf32>
    %c2_i32_22 = arith.constant 2 : i32
    %65 = tpu.dynamic_rotate %64 by %c2_i32_22 dim 0 : vector<8x128xf32>, i32 -> vector<8x128xf32>
    %c2_i32_23 = arith.constant 2 : i32
    %66 = vector.broadcast %c2_i32_23 : i32 to vector<8x128xi32>
    %67 = arith.cmpi sge, %18, %66 : vector<8x128xi32>
    %cst_24 = arith.constant 0.000000e+00 : f32
    %68 = vector.broadcast %cst_24 : f32 to vector<8x128xf32>
    %69 = arith.select %67, %65, %68 : vector<8x128xi1>, vector<8x128xf32>
    %70 = arith.addf %63, %69 : vector<8x128xf32>
    %71 = vector.extract_strided_slice %17 {offsets = [0, 1280], sizes = [8, 128], strides = [1, 1]} : vector<8x1664xf32> to vector<8x128xf32>
    %c4_i32 = arith.constant 4 : i32
    %72 = tpu.dynamic_rotate %71 by %c4_i32 dim 0 : vector<8x128xf32>, i32 -> vector<8x128xf32>
    %c4_i32_25 = arith.constant 4 : i32
    %73 = vector.broadcast %c4_i32_25 : i32 to vector<8x128xi32>
    %74 = arith.cmpi sge, %18, %73 : vector<8x128xi32>
    %cst_26 = arith.constant 0.000000e+00 : f32
    %75 = vector.broadcast %cst_26 : f32 to vector<8x128xf32>
    %76 = arith.select %74, %72, %75 : vector<8x128xi1>, vector<8x128xf32>
    %77 = arith.addf %70, %76 : vector<8x128xf32>
    %78 = vector.extract_strided_slice %17 {offsets = [0, 1408], sizes = [8, 128], strides = [1, 1]} : vector<8x1664xf32> to vector<8x128xf32>
    %c6_i32_27 = arith.constant 6 : i32
    %79 = tpu.dynamic_rotate %78 by %c6_i32_27 dim 0 : vector<8x128xf32>, i32 -> vector<8x128xf32>
    %c6_i32_28 = arith.constant 6 : i32
    %80 = vector.broadcast %c6_i32_28 : i32 to vector<8x128xi32>
    %81 = arith.cmpi sge, %18, %80 : vector<8x128xi32>
    %cst_29 = arith.constant 0.000000e+00 : f32
    %82 = vector.broadcast %cst_29 : f32 to vector<8x128xf32>
    %83 = arith.select %81, %79, %82 : vector<8x128xi1>, vector<8x128xf32>
    %84 = arith.addf %77, %83 : vector<8x128xf32>
    %85 = vector.extract_strided_slice %17 {offsets = [0, 1536], sizes = [8, 128], strides = [1, 1]} : vector<8x1664xf32> to vector<8x128xf32>
    %86 = tpu.concatenate %40, %62, %84, %85 in 1 : vector<8x128xf32>, vector<8x128xf32>, vector<8x128xf32>, vector<8x128xf32> -> vector<8x512xf32>
    %c0_30 = arith.constant 0 : index
    %c0_31 = arith.constant 0 : index
    %87 = vector.load %arg5[%c0_30, %c0_31] : memref<1x512xf32, #tpu.memory_space<vmem>>, vector<1x512xf32>
    %88 = vector.broadcast %87 : vector<1x512xf32> to vector<8x512xf32>
    %89 = arith.addf %86, %88 : vector<8x512xf32>
    %cst_32 = arith.constant 0.000000e+00 : f32
    %90 = vector.broadcast %cst_32 : f32 to vector<8x512xf32>
    %91 = arith.maximumf %89, %90 : vector<8x512xf32>
    %c0_33 = arith.constant 0 : index
    %c0_34 = arith.constant 0 : index
    %92 = vector.load %arg6[%c0_33, %c0_34] : memref<512x128xf32, #tpu.memory_space<vmem>>, vector<512x128xf32>
    %cst_35 = arith.constant dense<0.000000e+00> : vector<8x128xf32>
    %93 = tpu.matmul %91, %92, %cst_35 {dimension_numbers = #tpu.dot_dimension_numbers<[1], [0], [0], [1], [0, 0, 1, 1], [], []>} : vector<8x512xf32>, vector<512x128xf32>, vector<8x128xf32> -> vector<8x128xf32>
    %c0_36 = arith.constant 0 : index
    %c0_37 = arith.constant 0 : index
    %94 = vector.load %arg7[%c0_36, %c0_37] : memref<1x128xf32, #tpu.memory_space<vmem>>, vector<1x128xf32>
    %95 = vector.broadcast %94 : vector<1x128xf32> to vector<8x128xf32>
    %96 = arith.addf %93, %95 : vector<8x128xf32>
    %c0_38 = arith.constant 0 : index
    %c0_39 = arith.constant 0 : index
    %97 = vector.load %arg8[%c0_38, %c0_39] : memref<8x128xf32, #tpu.memory_space<vmem>>, vector<8x128xf32>
    tpu.vector_store %arg8[%c0_38, %c0_39], %96 {strides = array<i32>} : memref<8x128xf32, #tpu.memory_space<vmem>>, vector<8x128xf32>,
    return
  }
  func.func @transform_0(%arg0: i32) -> (i32, i32) {
    %c0_i32 = arith.constant 0 : i32
    %c0_i32_0 = arith.constant 0 : i32
    %c0_i32_1 = arith.constant 0 : i32
    return %c0_i32, %c0_i32_0 : i32, i32
  }
  func.func @transform_1(%arg0: i32) -> (i32, i32) {
    %c0_i32 = arith.constant 0 : i32
    %c0_i32_0 = arith.constant 0 : i32
    %c0_i32_1 = arith.constant 0 : i32
    return %c0_i32, %c0_i32_0 : i32, i32
  }
  func.func @transform_2(%arg0: i32) -> (i32, i32) {
    %c0_i32 = arith.constant 0 : i32
    %c0_i32_0 = arith.constant 0 : i32
    %c0_i32_1 = arith.constant 0 : i32
    return %c0_i32, %c0_i32_0 : i32, i32
  }
  func.func @transform_3(%arg0: i32) -> (i32, i32) {
    %c0_i32 = arith.constant 0 : i32
    %c0_i32_0 = arith.constant 0 : i32
    %c0_i32_1 = arith.constant 0 : i32
    return %c0_i32, %c0_i32_0 : i32, i32
  }
  func.func @transform_4(%arg0: i32) -> (i32, i32) {
    %c0_i32 = arith.constant 0 : i32
    %c0_i32_0 = arith.constant 0 : i32
    %c0_i32_1 = arith.constant 0 : i32
    return %c0_i32, %c0_i32_0 : i32, i32
  }
  func.func @transform_5(%arg0: i32) -> (i32, i32) {
    %c0_i32 = arith.constant 0 : i32
    %c0_i32_0 = arith.constant 0 : i32
    %c0_i32_1 = arith.constant 0 : i32
    return %c0_i32, %c0_i32_0 : i32, i32
  }
  func.func @transform_6(%arg0: i32) -> (i32, i32) {
    %c0_i32 = arith.constant 0 : i32
    %c0_i32_0 = arith.constant 0 : i32
    %c0_i32_1 = arith.constant 0 : i32
    return %c0_i32, %c0_i32_0 : i32, i32
  }
  func.func @transform_7(%arg0: i32) -> (i32, i32) {
    %c0_i32 = arith.constant 0 : i32
    %c0_i32_0 = arith.constant 0 : i32
    %c0_i32_1 = arith.constant 0 : i32
    return %c0_i32, %c0_i32_0 : i32, i32
  }
}

</mosaic_0001>

<llo_original>
// kernel: tpu_custom_call.1
$region0: #{tpu_custom_call.1}
  #allocation0 [shape = 'u32[]', space=smem, size = 0x4, offset = 0x4, fixed_abs, tag = 'smem constant byte address 0x4 - core index']
  #allocation1 [shape = 'u32[144,128]{1,0:T(1,128)}', space=vmem, size = 0x12000, scoped, tag = 'internal scratch']
  %s0 = inlined_call_operand.hbm [shape: f32[8,16], index: 0, kind: input, shape index: {}]
  %s1 = inlined_call_operand.hbm [shape: f32[16,128], index: 1, kind: input, shape index: {}]
  %s2 = inlined_call_operand.vmem [shape: f32[1,128], index: 2, kind: input, shape index: {}]
  %s3 = inlined_call_operand.hbm [shape: f32[128,1664], index: 3, kind: input, shape index: {}]
  %s4 = inlined_call_operand.vmem [shape: f32[1,512], index: 4, kind: input, shape index: {}]
  %s5 = inlined_call_operand.hbm [shape: f32[512,128], index: 5, kind: input, shape index: {}]
  %s6 = inlined_call_operand.vmem [shape: f32[1,128], index: 6, kind: input, shape index: {}]
  %s7 = inlined_call_operand.hbm [shape: f32[8,128], index: 7, kind: output, shape index: {}]
  %s8 = sld [smem:[#allocation0]]
  $region54: #{tpu_custom_call.1} parent=0
    _
  %s10 = ssub.s32 1, %s8
  %s11 = scalar_select 0, %s10, %s8
  $region1: #{tpu_custom_call.1} parent=0
    #allocation2 [shape = 'u8[4096]{0}', space=vmem, size = 0x1000, scoped, tag = 'input window, operand 0, single buffered']
    #allocation3 [shape = 's32[1]{0}', space=sflag, size = 0x4, scoped, tag = 'scoped memory for tpu_custom_call.1']
    #allocation4 [shape = 's32[1]{0}', space=sflag, size = 0x4, scoped, tag = 'scoped memory for tpu_custom_call.1']
    #allocation5 [shape = 'u8[8192]{0}', space=vmem, size = 0x2000, scoped, tag = 'input window, operand 1, single buffered']
    #allocation6 [shape = 's32[1]{0}', space=sflag, size = 0x4, scoped, tag = 'scoped memory for tpu_custom_call.1']
    #allocation7 [shape = 'u8[851968]{0}', space=vmem, size = 0xd0000, scoped, tag = 'input window, operand 3, single buffered']
    #allocation8 [shape = 'u8[262144]{0}', space=vmem, size = 0x40000, scoped, tag = 'input window, operand 5, single buffered']
    #allocation9 [shape = 's32[1]{0}', space=sflag, size = 0x4, scoped, tag = 'scoped memory for tpu_custom_call.1']
    #allocation10 [shape = 'u8[4096]{0}', space=vmem, size = 0x1000, scoped, tag = 'output window, operand 0, single buffered']
    %12 = vsyncpa [#allocation3], 0
    %13 = vsyncpa [#allocation6], 0
    %14 = vsyncpa [#allocation9], 0
    %15 = vsyncpa [#allocation4], 0
    // Predicated region
    $region2: #{tpu_custom_call.1} parent=1 // pred_check
      _
    $region3: #{tpu_custom_call.1} parent=1 // pred_check_branch
      %17 = sbr.rel (0) target = $region5
    $region4: #{tpu_custom_call.1} parent=1 // pred_region
      %s19 = ssub.s32 128, 128
      %20 = vsyncadd [#allocation3], %s19
      %s22 = sshll.u32 [#allocation2], 4
      %s23 = int_to_ptr.vmem [resolvable:$true] %s22
      %25 = dma.hbm_to_vmem [thread:$0]  %s0, 128, %s23, [#allocation3]
    $region5: #{tpu_custom_call.1} parent=1 // pred_fallthru
      _
    // Predicated region
    $region6: #{tpu_custom_call.1} parent=1 // pred_check
      _
    $region7: #{tpu_custom_call.1} parent=1 // pred_check_branch
      %27 = sbr.rel (0) target = $region9
    $region8: #{tpu_custom_call.1} parent=1 // pred_region
      %s29 = ssub.s32 256, 256
      %30 = vsyncadd [#allocation6], %s29
      %s31 = sshll.u32 [#allocation5], 4
      %s32 = int_to_ptr.vmem [resolvable:$true] %s31
      %37 = dma.hbm_to_vmem [thread:$0]  %s1, 256, %s32, [#allocation6], 128, 128, 8
    $region9: #{tpu_custom_call.1} parent=1 // pred_fallthru
      _
    // Predicated region
    $region10: #{tpu_custom_call.1} parent=1 // pred_check
      _
    $region11: #{tpu_custom_call.1} parent=1 // pred_check_branch
      %39 = sbr.rel (0) target = $region13
    $region12: #{tpu_custom_call.1} parent=1 // pred_region
      _
    $region13: #{tpu_custom_call.1} parent=1 // pred_fallthru
      _
    // Predicated region
    $region14: #{tpu_custom_call.1} parent=1 // pred_check
      _
    $region15: #{tpu_custom_call.1} parent=1 // pred_check_branch
      %41 = sbr.rel (0) target = $region17
    $region16: #{tpu_custom_call.1} parent=1 // pred_region
      %s43 = ssub.s32 26624, 26624
      %44 = vsyncadd [#allocation6], %s43
      %s45 = sshll.u32 [#allocation7], 4
      %s46 = int_to_ptr.vmem [resolvable:$true] %s45
      %51 = dma.hbm_to_vmem [thread:$0]  %s3, 26624, %s46, [#allocation6], 1664, 1664, 104
    $region17: #{tpu_custom_call.1} parent=1 // pred_fallthru
      _
    // Predicated region
    $region18: #{tpu_custom_call.1} parent=1 // pred_check
      _
    $region19: #{tpu_custom_call.1} parent=1 // pred_check_branch
      %53 = sbr.rel (0) target = $region21
    $region20: #{tpu_custom_call.1} parent=1 // pred_region
      _
    $region21: #{tpu_custom_call.1} parent=1 // pred_fallthru
      _
    // Predicated region
    $region22: #{tpu_custom_call.1} parent=1 // pred_check
      _
    $region23: #{tpu_custom_call.1} parent=1 // pred_check_branch
      %55 = sbr.rel (0) target = $region25
    $region24: #{tpu_custom_call.1} parent=1 // pred_region
      %s57 = ssub.s32 8192, 8192
      %58 = vsyncadd [#allocation9], %s57
      %s59 = sshll.u32 [#allocation8], 4
      %s60 = int_to_ptr.vmem [resolvable:$true] %s59
      %65 = dma.hbm_to_vmem [thread:$0]  %s5, 8192, %s60, [#allocation9], 128, 128, 8
    $region25: #{tpu_custom_call.1} parent=1 // pred_fallthru
      _
    // Predicated region
    $region26: #{tpu_custom_call.1} parent=1 // pred_check
      _
    $region27: #{tpu_custom_call.1} parent=1 // pred_check_branch
      %67 = sbr.rel (0) target = $region29
    $region28: #{tpu_custom_call.1} parent=1 // pred_region
      _
    $region29: #{tpu_custom_call.1} parent=1 // pred_fallthru
      _
    // Predicated region
    $region30: #{tpu_custom_call.1} parent=1 // pred_check
      _
    $region31: #{tpu_custom_call.1} parent=1 // pred_check_branch
      %69 = sbr.rel (0) target = $region33
    $region32: #{tpu_custom_call.1} parent=1 // pred_region
      %70 = dma.done [#allocation3], 128
    $region33: #{tpu_custom_call.1} parent=1 // pred_fallthru
      _
    // Predicated region
    $region34: #{tpu_custom_call.1} parent=1 // pred_check
      _
    $region35: #{tpu_custom_call.1} parent=1 // pred_check_branch
      %72 = sbr.rel (0) target = $region37
    $region36: #{tpu_custom_call.1} parent=1 // pred_region
      %73 = dma.done [#allocation6], 256
    $region37: #{tpu_custom_call.1} parent=1 // pred_fallthru
      _
    // Predicated region
    $region38: #{tpu_custom_call.1} parent=1 // pred_check
      _
    $region39: #{tpu_custom_call.1} parent=1 // pred_check_branch
      %75 = sbr.rel (0) target = $region41
    $region40: #{tpu_custom_call.1} parent=1 // pred_region
      %76 = dma.done [#allocation6], 26624
    $region41: #{tpu_custom_call.1} parent=1 // pred_fallthru
      _
    // Predicated region
    $region42: #{tpu_custom_call.1} parent=1 // pred_check
      _
    $region43: #{tpu_custom_call.1} parent=1 // pred_check_branch
      %78 = sbr.rel (0) target = $region45
    $region44: #{tpu_custom_call.1} parent=1 // pred_region
      %79 = dma.done [#allocation9], 8192
    $region45: #{tpu_custom_call.1} parent=1 // pred_fallthru
      _
    %v80 = vld [vmem:[#allocation2] sm:$0xff]
    %v81 = vld [vmem:[#allocation5] sm:$0xff]
    %v82 = vld [vmem:[#allocation5 + $0x8] sm:$0xff]
    %v83 = vld [vmem:[%s2] sm:$0x1]
    %v85 = vlaneseq
    %v86 = vshrl.u32 %v85, 7
    %v87 = vsub.s32 0, %v86
    %v88 = vrot.slane %v83, %v87
    %vm90 = vcmask 130048
    %v92 = vsel %vm90, %v80, 0
    %94 = vmatprep.subr.mxu0 0.0
    %95 = vmatpush1.msra.mxu0 0.0
    %96 = vmatprep.subr.mxu0 0.0
    %97 = vmatpush1.msra.mxu0 0.0
    %98 = vmatprep.subr.mxu0 0.0
    %99 = vmatpush1.msra.mxu0 0.0
    %100 = vmatprep.subr.mxu0 0.0
    %101 = vmatpush1.msra.mxu0 0.0
    %102 = vmatprep.subr.mxu0 0.0
    %103 = vmatpush1.msra.mxu0 0.0
    %104 = vmatprep.subr.mxu0 0.0
    %105 = vmatpush1.msra.mxu0 0.0
    %106 = vmatprep.subr.mxu0 0.0
    %107 = vmatpush1.msra.mxu0 0.0
    %108 = vmatprep.subr.mxu0 0.0
    %109 = vmatpush1.msra.mxu0 0.0
    %110 = vmatprep.subr.mxu0 0.0
    %111 = vmatpush1.msra.mxu0 0.0
    %112 = vmatprep.subr.mxu0 0.0
    %113 = vmatpush1.msra.mxu0 0.0
    %114 = vmatprep.subr.mxu0 0.0
    %115 = vmatpush1.msra.mxu0 0.0
    %116 = vmatprep.subr.mxu0 0.0
    %117 = vmatpush1.msra.mxu0 0.0
    %118 = vmatprep.subr.mxu0 0.0
    %119 = vmatpush1.msra.mxu0 0.0
    %120 = vmatprep.subr.mxu0 0.0
    %121 = vmatpush1.msra.mxu0 0.0
    %122 = vmatprep.subr.mxu0 0.0
    %123 = vmatpush1.msra.mxu0 %v82
    %124 = vmatprep.subr.mxu0 0.0
    %125 = vmatpush1.msra.mxu0 %v81
    %126 = vmatprep.subr.mxu0 0.0
    %127 = vmatpush2.msra.mxu0 0.0
    %128 = vmatprep.subr.mxu0 0.0
    %129 = vmatpush2.msra.mxu0 0.0
    %130 = vmatprep.subr.mxu0 0.0
    %131 = vmatpush2.msra.mxu0 0.0
    %132 = vmatprep.subr.mxu0 0.0
    %133 = vmatpush2.msra.mxu0 0.0
    %134 = vmatprep.subr.mxu0 0.0
    %135 = vmatpush2.msra.mxu0 0.0
    %136 = vmatprep.subr.mxu0 0.0
    %137 = vmatpush2.msra.mxu0 0.0
    %138 = vmatprep.subr.mxu0 0.0
    %139 = vmatpush2.msra.mxu0 0.0
    %140 = vmatprep.subr.mxu0 0.0
    %141 = vmatpush2.msra.mxu0 0.0
    %142 = vmatprep.subr.mxu0 0.0
    %143 = vmatpush2.msra.mxu0 0.0
    %144 = vmatprep.subr.mxu0 0.0
    %145 = vmatpush2.msra.mxu0 0.0
    %146 = vmatprep.subr.mxu0 0.0
    %147 = vmatpush2.msra.mxu0 0.0
    %148 = vmatprep.subr.mxu0 0.0
    %149 = vmatpush2.msra.mxu0 0.0
    %150 = vmatprep.subr.mxu0 0.0
    %151 = vmatpush2.msra.mxu0 0.0
    %152 = vmatprep.subr.mxu0 0.0
    %153 = vmatpush2.msra.mxu0 0.0
    %154 = vmatprep.subr.mxu0 0.0
    %155 = vmatpush2.msra.mxu0 0.0
    %156 = vmatprep.subr.mxu0 0.0
    %157 = vmatpush2.msra.mxu0 0.0
    %158 = vmatprep.mubr.f32.mxu0 0.0
    %159 = vmatmul.mubr.f32.gmra.mxu0 %v92
    %v160 = vpop.f32.mrf.mxu0
    %v161 = vadd.f32 %v88, %v160
    %v162 = vpop.f32.mrf.mxu0
    %163 = vdwg.mxu0
    %164 = vmax.xlane.f32.xlu0 %v161
    %v165 = vpop.xlane.xlu0 %164
    %v166 = vsub.f32 %v161, %v165
    %v167 = vmul.f32 %v166, 1.442695
    %v168 = vpow.pop %v167
    %169 = vadd.xlane.f32.xlu0 %v168
    %v170 = vpop.xlane.xlu0 %169
    %v171 = vrcp.pop %v170
    %v172 = vmul.f32 %v168, %v171
    %v173 = vld [vmem:[#allocation7] sm:$0xff]
    %v174 = vld [vmem:[#allocation7 + $0x8] sm:$0xff]
    %v175 = vld [vmem:[#allocation7 + $0x10] sm:$0xff]
    %v176 = vld [vmem:[#allocation7 + $0x18] sm:$0xff]
    %v177 = vld [vmem:[#allocation7 + $0x20] sm:$0xff]
    %v178 = vld [vmem:[#allocation7 + $0x28] sm:$0xff]
    %v179 = vld [vmem:[#allocation7 + $0x30] sm:$0xff]
    %v180 = vld [vmem:[#allocation7 + $0x38] sm:$0xff]
    %v181 = vld [vmem:[#allocation7 + $0x40] sm:$0xff]
    %v182 = vld [vmem:[#allocation7 + $0x48] sm:$0xff]
    %v183 = vld [vmem:[#allocation7 + $0x50] sm:$0xff]
    %v184 = vld [vmem:[#allocation7 + $0x58] sm:$0xff]
    %v185 = vld [vmem:[#allocation7 + $0x60] sm:$0xff]
    %v186 = vld [vmem:[#allocation7 + $0x68] sm:$0xff]
    %v187 = vld [vmem:[#allocation7 + $0x70] sm:$0xff]
    %v188 = vld [vmem:[#allocation7 + $0x78] sm:$0xff]
    %v189 = vld [vmem:[#allocation7 + $0x80] sm:$0xff]
    %v190 = vld [vmem:[#allocation7 + $0x88] sm:$0xff]
    %v191 = vld [vmem:[#allocation7 + $0x90] sm:$0xff]
    %v192 = vld [vmem:[#allocation7 + $0x98] sm:$0xff]
    %v193 = vld [vmem:[#allocation7 + $0xa0] sm:$0xff]
    %v194 = vld [vmem:[#allocation7 + $0xa8] sm:$0xff]
    %v195 = vld [vmem:[#allocation7 + $0xb0] sm:$0xff]
    %v196 = vld [vmem:[#allocation7 + $0xb8] sm:$0xff]
    %v197 = vld [vmem:[#allocation7 + $0xc0] sm:$0xff]
    %v198 = vld [vmem:[#allocation7 + $0xc8] sm:$0xff]
    %v199 = vld [vmem:[#allocation7 + $0xd0] sm:$0xff]
    %v200 = vld [vmem:[#allocation7 + $0xd8] sm:$0xff]
    %v201 = vld [vmem:[#allocation7 + $0xe0] sm:$0xff]
    %v202 = vld [vmem:[#allocation7 + $0xe8] sm:$0xff]
    %v203 = vld [vmem:[#allocation7 + $0xf0] sm:$0xff]
    %v204 = vld [vmem:[#allocation7 + $0xf8] sm:$0xff]
    %v205 = vld [vmem:[#allocation7 + $0x100] sm:$0xff]
    %v206 = vld [vmem:[#allocation7 + $0x108] sm:$0xff]
    %v207 = vld [vmem:[#allocation7 + $0x110] sm:$0xff]
    %v208 = vld [vmem:[#allocation7 + $0x118] sm:$0xff]
    %v209 = vld [vmem:[#allocation7 + $0x120] sm:$0xff]
    %v210 = vld [vmem:[#allocation7 + $0x128] sm:$0xff]
    %v211 = vld [vmem:[#allocation7 + $0x130] sm:$0xff]
    %v212 = vld [vmem:[#allocation7 + $0x138] sm:$0xff]
    %v213 = vld [vmem:[#allocation7 + $0x140] sm:$0xff]
    %v214 = vld [vmem:[#allocation7 + $0x148] sm:$0xff]
    %v215 = vld [vmem:[#allocation7 + $0x150] sm:$0xff]
    %v216 = vld [vmem:[#allocation7 + $0x158] sm:$0xff]
    %v217 = vld [vmem:[#allocation7 + $0x160] sm:$0xff]
    %v218 = vld [vmem:[#allocation7 + $0x168] sm:$0xff]
    %v219 = vld [vmem:[#allocation7 + $0x170] sm:$0xff]
    %v220 = vld [vmem:[#allocation7 + $0x178] sm:$0xff]
    %v221 = vld [vmem:[#allocation7 + $0x180] sm:$0xff]
    %v222 = vld [vmem:[#allocation7 + $0x188] sm:$0xff]
    %v223 = vld [vmem:[#allocation7 + $0x190] sm:$0xff]
    %v224 = vld [vmem:[#allocation7 + $0x198] sm:$0xff]
    %v225 = vld [vmem:[#allocation7 + $0x1a0] sm:$0xff]
    %v226 = vld [vmem:[#allocation7 + $0x1a8] sm:$0xff]
    %v227 = vld [vmem:[#allocation7 + $0x1b0] sm:$0xff]
    %v228 = vld [vmem:[#allocation7 + $0x1b8] sm:$0xff]
    %v229 = vld [vmem:[#allocation7 + $0x1c0] sm:$0xff]
    %v230 = vld [vmem:[#allocation7 + $0x1c8] sm:$0xff]
    %v231 = vld [vmem:[#allocation7 + $0x1d0] sm:$0xff]
    %v232 = vld [vmem:[#allocation7 + $0x1d8] sm:$0xff]
    %v233 = vld [vmem:[#allocation7 + $0x1e0] sm:$0xff]
    %v234 = vld [vmem:[#allocation7 + $0x1e8] sm:$0xff]
    %v235 = vld [vmem:[#allocation7 + $0x1f0] sm:$0xff]
    %v236 = vld [vmem:[#allocation7 + $0x1f8] sm:$0xff]
    %v237 = vld [vmem:[#allocation7 + $0x200] sm:$0xff]
    %v238 = vld [vmem:[#allocation7 + $0x208] sm:$0xff]
    %v239 = vld [vmem:[#allocation7 + $0x210] sm:$0xff]
    %v240 = vld [vmem:[#allocation7 + $0x218] sm:$0xff]
    %v241 = vld [vmem:[#allocation7 + $0x220] sm:$0xff]
    %v242 = vld [vmem:[#allocation7 + $0x228] sm:$0xff]
    %v243 = vld [vmem:[#allocation7 + $0x230] sm:$0xff]
    %v244 = vld [vmem:[#allocation7 + $0x238] sm:$0xff]
    %v245 = vld [vmem:[#allocation7 + $0x240] sm:$0xff]
    %v246 = vld [vmem:[#allocation7 + $0x248] sm:$0xff]
    %v247 = vld [vmem:[#allocation7 + $0x250] sm:$0xff]
    %v248 = vld [vmem:[#allocation7 + $0x258] sm:$0xff]
    %v249 = vld [vmem:[#allocation7 + $0x260] sm:$0xff]
    %v250 = vld [vmem:[#allocation7 + $0x268] sm:$0xff]
    %v251 = vld [vmem:[#allocation7 + $0x270] sm:$0xff]
    %v252 = vld [vmem:[#allocation7 + $0x278] sm:$0xff]
    %v253 = vld [vmem:[#allocation7 + $0x280] sm:$0xff]
    %v254 = vld [vmem:[#allocation7 + $0x288] sm:$0xff]
    %v255 = vld [vmem:[#allocation7 + $0x290] sm:$0xff]
    %v256 = vld [vmem:[#allocation7 + $0x298] sm:$0xff]
    %v257 = vld [vmem:[#allocation7 + $0x2a0] sm:$0xff]
    %v258 = vld [vmem:[#allocation7 + $0x2a8] sm:$0xff]
    %v259 = vld [vmem:[#allocation7 + $0x2b0] sm:$0xff]
    %v260 = vld [vmem:[#allocation7 + $0x2b8] sm:$0xff]
    %v261 = vld [vmem:[#allocation7 + $0x2c0] sm:$0xff]
    %v262 = vld [vmem:[#allocation7 + $0x2c8] sm:$0xff]
    %v263 = vld [vmem:[#allocation7 + $0x2d0] sm:$0xff]
    %v264 = vld [vmem:[#allocation7 + $0x2d8] sm:$0xff]
    %v265 = vld [vmem:[#allocation7 + $0x2e0] sm:$0xff]
    %v266 = vld [vmem:[#allocation7 + $0x2e8] sm:$0xff]
    %v267 = vld [vmem:[#allocation7 + $0x2f0] sm:$0xff]
    %v268 = vld [vmem:[#allocation7 + $0x2f8] sm:$0xff]
    %v269 = vld [vmem:[#allocation7 + $0x300] sm:$0xff]
    %v270 = vld [vmem:[#allocation7 + $0x308] sm:$0xff]
    %v271 = vld [vmem:[#allocation7 + $0x310] sm:$0xff]
    %v272 = vld [vmem:[#allocation7 + $0x318] sm:$0xff]
    %v273 = vld [vmem:[#allocation7 + $0x320] sm:$0xff]
    %v274 = vld [vmem:[#allocation7 + $0x328] sm:$0xff]
    %v275 = vld [vmem:[#allocation7 + $0x330] sm:$0xff]
    %v276 = vld [vmem:[#allocation7 + $0x338] sm:$0xff]
    %v277 = vld [vmem:[#allocation7 + $0x340] sm:$0xff]
    %v278 = vld [vmem:[#allocation7 + $0x348] sm:$0xff]
    %v279 = vld [vmem:[#allocation7 + $0x350] sm:$0xff]
    %v280 = vld [vmem:[#allocation7 + $0x358] sm:$0xff]
    %v281 = vld [vmem:[#allocation7 + $0x360] sm:$0xff]
    %v282 = vld [vmem:[#allocation7 + $0x368] sm:$0xff]
    %v283 = vld [vmem:[#allocation7 + $0x370] sm:$0xff]
    %v284 = vld [vmem:[#allocation7 + $0x378] sm:$0xff]
    %v285 = vld [vmem:[#allocation7 + $0x380] sm:$0xff]
    %v286 = vld [vmem:[#allocation7 + $0x388] sm:$0xff]
    %v287 = vld [vmem:[#allocation7 + $0x390] sm:$0xff]
    %v288 = vld [vmem:[#allocation7 + $0x398] sm:$0xff]
    %v289 = vld [vmem:[#allocation7 + $0x3a0] sm:$0xff]
    %v290 = vld [vmem:[#allocation7 + $0x3a8] sm:$0xff]
    %v291 = vld [vmem:[#allocation7 + $0x3b0] sm:$0xff]
    %v292 = vld [vmem:[#allocation7 + $0x3b8] sm:$0xff]
    %v293 = vld [vmem:[#allocation7 + $0x3c0] sm:$0xff]
    %v294 = vld [vmem:[#allocation7 + $0x3c8] sm:$0xff]
    %v295 = vld [vmem:[#allocation7 + $0x3d0] sm:$0xff]
    %v296 = vld [vmem:[#allocation7 + $0x3d8] sm:$0xff]
    %v297 = vld [vmem:[#allocation7 + $0x3e0] sm:$0xff]
    %v298 = vld [vmem:[#allocation7 + $0x3e8] sm:$0xff]
    %v299 = vld [vmem:[#allocation7 + $0x3f0] sm:$0xff]
    %v300 = vld [vmem:[#allocation7 + $0x3f8] sm:$0xff]
    %v301 = vld [vmem:[#allocation7 + $0x400] sm:$0xff]
    %v302 = vld [vmem:[#allocation7 + $0x408] sm:$0xff]
    %v303 = vld [vmem:[#allocation7 + $0x410] sm:$0xff]
    %v304 = vld [vmem:[#allocation7 + $0x418] sm:$0xff]
    %v305 = vld [vmem:[#allocation7 + $0x420] sm:$0xff]
    %v306 = vld [vmem:[#allocation7 + $0x428] sm:$0xff]
    %v307 = vld [vmem:[#allocation7 + $0x430] sm:$0xff]
    %v308 = vld [vmem:[#allocation7 + $0x438] sm:$0xff]
    %v309 = vld [vmem:[#allocation7 + $0x440] sm:$0xff]
    %v310 = vld [vmem:[#allocation7 + $0x448] sm:$0xff]
    %v311 = vld [vmem:[#allocation7 + $0x450] sm:$0xff]
    %v312 = vld [vmem:[#allocation7 + $0x458] sm:$0xff]
    %v313 = vld [vmem:[#allocation7 + $0x460] sm:$0xff]
    %v314 = vld [vmem:[#allocation7 + $0x468] sm:$0xff]
    %v315 = vld [vmem:[#allocation7 + $0x470] sm:$0xff]
    %v316 = vld [vmem:[#allocation7 + $0x478] sm:$0xff]
    %v317 = vld [vmem:[#allocation7 + $0x480] sm:$0xff]
    %v318 = vld [vmem:[#allocation7 + $0x488] sm:$0xff]
    %v319 = vld [vmem:[#allocation7 + $0x490] sm:$0xff]
    %v320 = vld [vmem:[#allocation7 + $0x498] sm:$0xff]
    %v321 = vld [vmem:[#allocation7 + $0x4a0] sm:$0xff]
    %v322 = vld [vmem:[#allocation7 + $0x4a8] sm:$0xff]
    %v323 = vld [vmem:[#allocation7 + $0x4b0] sm:$0xff]
    %v324 = vld [vmem:[#allocation7 + $0x4b8] sm:$0xff]
    %v325 = vld [vmem:[#allocation7 + $0x4c0] sm:$0xff]
    %v326 = vld [vmem:[#allocation7 + $0x4c8] sm:$0xff]
    %v327 = vld [vmem:[#allocation7 + $0x4d0] sm:$0xff]
    %v328 = vld [vmem:[#allocation7 + $0x4d8] sm:$0xff]
    %v329 = vld [vmem:[#allocation7 + $0x4e0] sm:$0xff]
    %v330 = vld [vmem:[#allocation7 + $0x4e8] sm:$0xff]
    %v331 = vld [vmem:[#allocation7 + $0x4f0] sm:$0xff]
    %v332 = vld [vmem:[#allocation7 + $0x4f8] sm:$0xff]
    %v333 = vld [vmem:[#allocation7 + $0x500] sm:$0xff]
    %v334 = vld [vmem:[#allocation7 + $0x508] sm:$0xff]
    %v335 = vld [vmem:[#allocation7 + $0x510] sm:$0xff]
    %v336 = vld [vmem:[#allocation7 + $0x518] sm:$0xff]
    %v337 = vld [vmem:[#allocation7 + $0x520] sm:$0xff]
    %v338 = vld [vmem:[#allocation7 + $0x528] sm:$0xff]
    %v339 = vld [vmem:[#allocation7 + $0x530] sm:$0xff]
    %v340 = vld [vmem:[#allocation7 + $0x538] sm:$0xff]
    %v341 = vld [vmem:[#allocation7 + $0x540] sm:$0xff]
    %v342 = vld [vmem:[#allocation7 + $0x548] sm:$0xff]
    %v343 = vld [vmem:[#allocation7 + $0x550] sm:$0xff]
    %v344 = vld [vmem:[#allocation7 + $0x558] sm:$0xff]
    %v345 = vld [vmem:[#allocation7 + $0x560] sm:$0xff]
    %v346 = vld [vmem:[#allocation7 + $0x568] sm:$0xff]
    %v347 = vld [vmem:[#allocation7 + $0x570] sm:$0xff]
    %v348 = vld [vmem:[#allocation7 + $0x578] sm:$0xff]
    %v349 = vld [vmem:[#allocation7 + $0x580] sm:$0xff]
    %v350 = vld [vmem:[#allocation7 + $0x588] sm:$0xff]
    %v351 = vld [vmem:[#allocation7 + $0x590] sm:$0xff]
    %v352 = vld [vmem:[#allocation7 + $0x598] sm:$0xff]
    %v353 = vld [vmem:[#allocation7 + $0x5a0] sm:$0xff]
    %v354 = vld [vmem:[#allocation7 + $0x5a8] sm:$0xff]
    %v355 = vld [vmem:[#allocation7 + $0x5b0] sm:$0xff]
    %v356 = vld [vmem:[#allocation7 + $0x5b8] sm:$0xff]
    %v357 = vld [vmem:[#allocation7 + $0x5c0] sm:$0xff]
    %v358 = vld [vmem:[#allocation7 + $0x5c8] sm:$0xff]
    %v359 = vld [vmem:[#allocation7 + $0x5d0] sm:$0xff]
    %v360 = vld [vmem:[#allocation7 + $0x5d8] sm:$0xff]
    %v361 = vld [vmem:[#allocation7 + $0x5e0] sm:$0xff]
    %v362 = vld [vmem:[#allocation7 + $0x5e8] sm:$0xff]
    %v363 = vld [vmem:[#allocation7 + $0x5f0] sm:$0xff]
    %v364 = vld [vmem:[#allocation7 + $0x5f8] sm:$0xff]
    %v365 = vld [vmem:[#allocation7 + $0x600] sm:$0xff]
    %v366 = vld [vmem:[#allocation7 + $0x608] sm:$0xff]
    %v367 = vld [vmem:[#allocation7 + $0x610] sm:$0xff]
    %v368 = vld [vmem:[#allocation7 + $0x618] sm:$0xff]
    %v369 = vld [vmem:[#allocation7 + $0x620] sm:$0xff]
    %v370 = vld [vmem:[#allocation7 + $0x628] sm:$0xff]
    %v371 = vld [vmem:[#allocation7 + $0x630] sm:$0xff]
    %v372 = vld [vmem:[#allocation7 + $0x638] sm:$0xff]
    %v373 = vld [vmem:[#allocation7 + $0x640] sm:$0xff]
    %v374 = vld [vmem:[#allocation7 + $0x648] sm:$0xff]
    %v375 = vld [vmem:[#allocation7 + $0x650] sm:$0xff]
    %v376 = vld [vmem:[#allocation7 + $0x658] sm:$0xff]
    %v377 = vld [vmem:[#allocation7 + $0x660] sm:$0xff]
    %v378 = vld [vmem:[#allocation7 + $0x668] sm:$0xff]
    %v379 = vld [vmem:[#allocation7 + $0x670] sm:$0xff]
    %v380 = vld [vmem:[#allocation7 + $0x678] sm:$0xff]
    %381 = vmatprep.subr.mxu0 %v369
    %382 = vmatpush1.msra.mxu0 %v368
    %383 = vmatprep.subr.mxu0 %v356
    %384 = vmatpush1.msra.mxu0 %v355
    %385 = vmatprep.subr.mxu0 %v343
    %386 = vmatpush1.msra.mxu0 %v342
    %387 = vmatprep.subr.mxu0 %v330
    %388 = vmatpush1.msra.mxu0 %v329
    %389 = vmatprep.subr.mxu0 %v317
    %390 = vmatpush1.msra.mxu0 %v316
    %391 = vmatprep.subr.mxu0 %v304
    %392 = vmatpush1.msra.mxu0 %v303
    %393 = vmatprep.subr.mxu0 %v291
    %394 = vmatpush1.msra.mxu0 %v290
    %395 = vmatprep.subr.mxu0 %v278
    %396 = vmatpush1.msra.mxu0 %v277
    %397 = vmatprep.subr.mxu0 %v265
    %398 = vmatpush1.msra.mxu0 %v264
    %399 = vmatprep.subr.mxu0 %v252
    %400 = vmatpush1.msra.mxu0 %v251
    %401 = vmatprep.subr.mxu0 %v239
    %402 = vmatpush1.msra.mxu0 %v238
    %403 = vmatprep.subr.mxu0 %v226
    %404 = vmatpush1.msra.mxu0 %v225
    %405 = vmatprep.subr.mxu0 %v213
    %406 = vmatpush1.msra.mxu0 %v212
    %407 = vmatprep.subr.mxu0 %v200
    %408 = vmatpush1.msra.mxu0 %v199
    %409 = vmatprep.subr.mxu0 %v187
    %410 = vmatpush1.msra.mxu0 %v186
    %411 = vmatprep.subr.mxu0 %v174
    %412 = vmatpush1.msra.mxu0 %v173
    %413 = vmatprep.subr.mxu0 0.0
    %414 = vmatpush2.msra.mxu0 0.0
    %415 = vmatprep.subr.mxu0 0.0
    %416 = vmatpush2.msra.mxu0 0.0
    %417 = vmatprep.subr.mxu0 0.0
    %418 = vmatpush2.msra.mxu0 0.0
    %419 = vmatprep.subr.mxu0 0.0
    %420 = vmatpush2.msra.mxu0 0.0
    %421 = vmatprep.subr.mxu0 0.0
    %422 = vmatpush2.msra.mxu0 0.0
    %423 = vmatprep.subr.mxu0 0.0
    %424 = vmatpush2.msra.mxu0 0.0
    %425 = vmatprep.subr.mxu0 0.0
    %426 = vmatpush2.msra.mxu0 0.0
    %427 = vmatprep.subr.mxu0 0.0
    %428 = vmatpush2.msra.mxu0 0.0
    %429 = vmatprep.subr.mxu0 0.0
    %430 = vmatpush2.msra.mxu0 0.0
    %431 = vmatprep.subr.mxu0 0.0
    %432 = vmatpush2.msra.mxu0 0.0
    %433 = vmatprep.subr.mxu0 0.0
    %434 = vmatpush2.msra.mxu0 0.0
    %435 = vmatprep.subr.mxu0 0.0
    %436 = vmatpush2.msra.mxu0 0.0
    %437 = vmatprep.subr.mxu0 0.0
    %438 = vmatpush2.msra.mxu0 0.0
    %439 = vmatprep.subr.mxu0 0.0
    %440 = vmatpush2.msra.mxu0 0.0
    %441 = vmatprep.subr.mxu0 0.0
    %442 = vmatpush2.msra.mxu0 0.0
    %443 = vmatprep.subr.mxu0 0.0
    %444 = vmatpush2.msra.mxu0 0.0
    %445 = vmatprep.mubr.f32.mxu0 0.0
    %446 = vmatmul.mubr.f32.gmra.mxu0 %v172
    %v447 = vpop.f32.mrf.mxu0
    %v448 = vadd.f32 0.0, %v447
    %v449 = vpop.f32.mrf.mxu0
    %v450 = vadd.f32 0.0, %v449
    %451 = vdwg.mxu0
    %452 = vmatprep.subr.mxu0 %v371
    %453 = vmatpush1.msra.mxu0 %v370
    %454 = vmatprep.subr.mxu0 %v358
    %455 = vmatpush1.msra.mxu0 %v357
    %456 = vmatprep.subr.mxu0 %v345
    %457 = vmatpush1.msra.mxu0 %v344
    %458 = vmatprep.subr.mxu0 %v332
    %459 = vmatpush1.msra.mxu0 %v331
    %460 = vmatprep.subr.mxu0 %v319
    %461 = vmatpush1.msra.mxu0 %v318
    %462 = vmatprep.subr.mxu0 %v306
    %463 = vmatpush1.msra.mxu0 %v305
    %464 = vmatprep.subr.mxu0 %v293
    %465 = vmatpush1.msra.mxu0 %v292
    %466 = vmatprep.subr.mxu0 %v280
    %467 = vmatpush1.msra.mxu0 %v279
    %468 = vmatprep.subr.mxu0 %v267
    %469 = vmatpush1.msra.mxu0 %v266
    %470 = vmatprep.subr.mxu0 %v254
    %471 = vmatpush1.msra.mxu0 %v253
    %472 = vmatprep.subr.mxu0 %v241
    %473 = vmatpush1.msra.mxu0 %v240
    %474 = vmatprep.subr.mxu0 %v228
    %475 = vmatpush1.msra.mxu0 %v227
    %476 = vmatprep.subr.mxu0 %v215
    %477 = vmatpush1.msra.mxu0 %v214
    %478 = vmatprep.subr.mxu0 %v202
    %479 = vmatpush1.msra.mxu0 %v201
    %480 = vmatprep.subr.mxu0 %v189
    %481 = vmatpush1.msra.mxu0 %v188
    %482 = vmatprep.subr.mxu0 %v176
    %483 = vmatpush1.msra.mxu0 %v175
    %484 = vmatprep.subr.mxu0 0.0
    %485 = vmatpush2.msra.mxu0 0.0
    %486 = vmatprep.subr.mxu0 0.0
    %487 = vmatpush2.msra.mxu0 0.0
    %488 = vmatprep.subr.mxu0 0.0
    %489 = vmatpush2.msra.mxu0 0.0
    %490 = vmatprep.subr.mxu0 0.0
    %491 = vmatpush2.msra.mxu0 0.0
    %492 = vmatprep.subr.mxu0 0.0
    %493 = vmatpush2.msra.mxu0 0.0
    %494 = vmatprep.subr.mxu0 0.0
    %495 = vmatpush2.msra.mxu0 0.0
    %496 = vmatprep.subr.mxu0 0.0
    %497 = vmatpush2.msra.mxu0 0.0
    %498 = vmatprep.subr.mxu0 0.0
    %499 = vmatpush2.msra.mxu0 0.0
    %500 = vmatprep.subr.mxu0 0.0
    %501 = vmatpush2.msra.mxu0 0.0
    %502 = vmatprep.subr.mxu0 0.0
    %503 = vmatpush2.msra.mxu0 0.0
    %504 = vmatprep.subr.mxu0 0.0
    %505 = vmatpush2.msra.mxu0 0.0
    %506 = vmatprep.subr.mxu0 0.0
    %507 = vmatpush2.msra.mxu0 0.0
    %508 = vmatprep.subr.mxu0 0.0
    %509 = vmatpush2.msra.mxu0 0.0
    %510 = vmatprep.subr.mxu0 0.0
    %511 = vmatpush2.msra.mxu0 0.0
    %512 = vmatprep.subr.mxu0 0.0
    %513 = vmatpush2.msra.mxu0 0.0
    %514 = vmatprep.subr.mxu0 0.0
    %515 = vmatpush2.msra.mxu0 0.0
    %516 = vmatprep.mubr.f32.mxu0 0.0
    %517 = vmatmul.mubr.f32.gmra.mxu0 %v172
    %v518 = vpop.f32.mrf.mxu0
    %v519 = vadd.f32 0.0, %v518
    %v520 = vpop.f32.mrf.mxu0
    %v521 = vadd.f32 0.0, %v520
    %522 = vdwg.mxu0
    %523 = vmatprep.subr.mxu0 %v373
    %524 = vmatpush1.msra.mxu0 %v372
    %525 = vmatprep.subr.mxu0 %v360
    %526 = vmatpush1.msra.mxu0 %v359
    %527 = vmatprep.subr.mxu0 %v347
    %528 = vmatpush1.msra.mxu0 %v346
    %529 = vmatprep.subr.mxu0 %v334
    %530 = vmatpush1.msra.mxu0 %v333
    %531 = vmatprep.subr.mxu0 %v321
    %532 = vmatpush1.msra.mxu0 %v320
    %533 = vmatprep.subr.mxu0 %v308
    %534 = vmatpush1.msra.mxu0 %v307
    %535 = vmatprep.subr.mxu0 %v295
    %536 = vmatpush1.msra.mxu0 %v294
    %537 = vmatprep.subr.mxu0 %v282
    %538 = vmatpush1.msra.mxu0 %v281
    %539 = vmatprep.subr.mxu0 %v269
    %540 = vmatpush1.msra.mxu0 %v268
    %541 = vmatprep.subr.mxu0 %v256
    %542 = vmatpush1.msra.mxu0 %v255
    %543 = vmatprep.subr.mxu0 %v243
    %544 = vmatpush1.msra.mxu0 %v242
    %545 = vmatprep.subr.mxu0 %v230
    %546 = vmatpush1.msra.mxu0 %v229
    %547 = vmatprep.subr.mxu0 %v217
    %548 = vmatpush1.msra.mxu0 %v216
    %549 = vmatprep.subr.mxu0 %v204
    %550 = vmatpush1.msra.mxu0 %v203
    %551 = vmatprep.subr.mxu0 %v191
    %552 = vmatpush1.msra.mxu0 %v190
    %553 = vmatprep.subr.mxu0 %v178
    %554 = vmatpush1.msra.mxu0 %v177
    %555 = vmatprep.subr.mxu0 0.0
    %556 = vmatpush2.msra.mxu0 0.0
    %557 = vmatprep.subr.mxu0 0.0
    %558 = vmatpush2.msra.mxu0 0.0
    %559 = vmatprep.subr.mxu0 0.0
    %560 = vmatpush2.msra.mxu0 0.0
    %561 = vmatprep.subr.mxu0 0.0
    %562 = vmatpush2.msra.mxu0 0.0
    %563 = vmatprep.subr.mxu0 0.0
    %564 = vmatpush2.msra.mxu0 0.0
    %565 = vmatprep.subr.mxu0 0.0
    %566 = vmatpush2.msra.mxu0 0.0
    %567 = vmatprep.subr.mxu0 0.0
    %568 = vmatpush2.msra.mxu0 0.0
    %569 = vmatprep.subr.mxu0 0.0
    %570 = vmatpush2.msra.mxu0 0.0
    %571 = vmatprep.subr.mxu0 0.0
    %572 = vmatpush2.msra.mxu0 0.0
    %573 = vmatprep.subr.mxu0 0.0
    %574 = vmatpush2.msra.mxu0 0.0
    %575 = vmatprep.subr.mxu0 0.0
    %576 = vmatpush2.msra.mxu0 0.0
    %577 = vmatprep.subr.mxu0 0.0
    %578 = vmatpush2.msra.mxu0 0.0
    %579 = vmatprep.subr.mxu0 0.0
    %580 = vmatpush2.msra.mxu0 0.0
    %581 = vmatprep.subr.mxu0 0.0
    %582 = vmatpush2.msra.mxu0 0.0
    %583 = vmatprep.subr.mxu0 0.0
    %584 = vmatpush2.msra.mxu0 0.0
    %585 = vmatprep.subr.mxu0 0.0
    %586 = vmatpush2.msra.mxu0 0.0
    %587 = vmatprep.mubr.f32.mxu0 0.0
    %588 = vmatmul.mubr.f32.gmra.mxu0 %v172
    %v589 = vpop.f32.mrf.mxu0
    %v590 = vadd.f32 0.0, %v589
    %v591 = vpop.f32.mrf.mxu0
    %v592 = vadd.f32 0.0, %v591
    %593 = vdwg.mxu0
    %594 = vmatprep.subr.mxu0 %v375
    %595 = vmatpush1.msra.mxu0 %v374
    %596 = vmatprep.subr.mxu0 %v362
    %597 = vmatpush1.msra.mxu0 %v361
    %598 = vmatprep.subr.mxu0 %v349
    %599 = vmatpush1.msra.mxu0 %v348
    %600 = vmatprep.subr.mxu0 %v336
    %601 = vmatpush1.msra.mxu0 %v335
    %602 = vmatprep.subr.mxu0 %v323
    %603 = vmatpush1.msra.mxu0 %v322
    %604 = vmatprep.subr.mxu0 %v310
    %605 = vmatpush1.msra.mxu0 %v309
    %606 = vmatprep.subr.mxu0 %v297
    %607 = vmatpush1.msra.mxu0 %v296
    %608 = vmatprep.subr.mxu0 %v284
    %609 = vmatpush1.msra.mxu0 %v283
    %610 = vmatprep.subr.mxu0 %v271
    %611 = vmatpush1.msra.mxu0 %v270
    %612 = vmatprep.subr.mxu0 %v258
    %613 = vmatpush1.msra.mxu0 %v257
    %614 = vmatprep.subr.mxu0 %v245
    %615 = vmatpush1.msra.mxu0 %v244
    %616 = vmatprep.subr.mxu0 %v232
    %617 = vmatpush1.msra.mxu0 %v231
    %618 = vmatprep.subr.mxu0 %v219
    %619 = vmatpush1.msra.mxu0 %v218
    %620 = vmatprep.subr.mxu0 %v206
    %621 = vmatpush1.msra.mxu0 %v205
    %622 = vmatprep.subr.mxu0 %v193
    %623 = vmatpush1.msra.mxu0 %v192
    %624 = vmatprep.subr.mxu0 %v180
    %625 = vmatpush1.msra.mxu0 %v179
    %626 = vmatprep.subr.mxu0 0.0
    %627 = vmatpush2.msra.mxu0 0.0
    %628 = vmatprep.subr.mxu0 0.0
    %629 = vmatpush2.msra.mxu0 0.0
    %630 = vmatprep.subr.mxu0 0.0
    %631 = vmatpush2.msra.mxu0 0.0
    %632 = vmatprep.subr.mxu0 0.0
    %633 = vmatpush2.msra.mxu0 0.0
    %634 = vmatprep.subr.mxu0 0.0
    %635 = vmatpush2.msra.mxu0 0.0
    %636 = vmatprep.subr.mxu0 0.0
    %637 = vmatpush2.msra.mxu0 0.0
    %638 = vmatprep.subr.mxu0 0.0
    %639 = vmatpush2.msra.mxu0 0.0
    %640 = vmatprep.subr.mxu0 0.0
    %641 = vmatpush2.msra.mxu0 0.0
    %642 = vmatprep.subr.mxu0 0.0
    %643 = vmatpush2.msra.mxu0 0.0
    %644 = vmatprep.subr.mxu0 0.0
    %645 = vmatpush2.msra.mxu0 0.0
    %646 = vmatprep.subr.mxu0 0.0
    %647 = vmatpush2.msra.mxu0 0.0
    %648 = vmatprep.subr.mxu0 0.0
    %649 = vmatpush2.msra.mxu0 0.0
    %650 = vmatprep.subr.mxu0 0.0
    %651 = vmatpush2.msra.mxu0 0.0
    %652 = vmatprep.subr.mxu0 0.0
    %653 = vmatpush2.msra.mxu0 0.0
    %654 = vmatprep.subr.mxu0 0.0
    %655 = vmatpush2.msra.mxu0 0.0
    %656 = vmatprep.subr.mxu0 0.0
    %657 = vmatpush2.msra.mxu0 0.0
    %658 = vmatprep.mubr.f32.mxu0 0.0
    %659 = vmatmul.mubr.f32.gmra.mxu0 %v172
    %v660 = vpop.f32.mrf.mxu0
    %v661 = vadd.f32 0.0, %v660
    %v662 = vpop.f32.mrf.mxu0
    %v663 = vadd.f32 0.0, %v662
    %664 = vdwg.mxu0
    %665 = vmatprep.subr.mxu0 %v377
    %666 = vmatpush1.msra.mxu0 %v376
    %667 = vmatprep.subr.mxu0 %v364
    %668 = vmatpush1.msra.mxu0 %v363
    %669 = vmatprep.subr.mxu0 %v351
    %670 = vmatpush1.msra.mxu0 %v350
    %671 = vmatprep.subr.mxu0 %v338
    %672 = vmatpush1.msra.mxu0 %v337
    %673 = vmatprep.subr.mxu0 %v325
    %674 = vmatpush1.msra.mxu0 %v324
    %675 = vmatprep.subr.mxu0 %v312
    %676 = vmatpush1.msra.mxu0 %v311
    %677 = vmatprep.subr.mxu0 %v299
    %678 = vmatpush1.msra.mxu0 %v298
    %679 = vmatprep.subr.mxu0 %v286
    %680 = vmatpush1.msra.mxu0 %v285
    %681 = vmatprep.subr.mxu0 %v273
    %682 = vmatpush1.msra.mxu0 %v272
    %683 = vmatprep.subr.mxu0 %v260
    %684 = vmatpush1.msra.mxu0 %v259
    %685 = vmatprep.subr.mxu0 %v247
    %686 = vmatpush1.msra.mxu0 %v246
    %687 = vmatprep.subr.mxu0 %v234
    %688 = vmatpush1.msra.mxu0 %v233
    %689 = vmatprep.subr.mxu0 %v221
    %690 = vmatpush1.msra.mxu0 %v220
    %691 = vmatprep.subr.mxu0 %v208
    %692 = vmatpush1.msra.mxu0 %v207
    %693 = vmatprep.subr.mxu0 %v195
    %694 = vmatpush1.msra.mxu0 %v194
    %695 = vmatprep.subr.mxu0 %v182
    %696 = vmatpush1.msra.mxu0 %v181
    %697 = vmatprep.subr.mxu0 0.0
    %698 = vmatpush2.msra.mxu0 0.0
    %699 = vmatprep.subr.mxu0 0.0
    %700 = vmatpush2.msra.mxu0 0.0
    %701 = vmatprep.subr.mxu0 0.0
    %702 = vmatpush2.msra.mxu0 0.0
    %703 = vmatprep.subr.mxu0 0.0
    %704 = vmatpush2.msra.mxu0 0.0
    %705 = vmatprep.subr.mxu0 0.0
    %706 = vmatpush2.msra.mxu0 0.0
    %707 = vmatprep.subr.mxu0 0.0
    %708 = vmatpush2.msra.mxu0 0.0
    %709 = vmatprep.subr.mxu0 0.0
    %710 = vmatpush2.msra.mxu0 0.0
    %711 = vmatprep.subr.mxu0 0.0
    %712 = vmatpush2.msra.mxu0 0.0
    %713 = vmatprep.subr.mxu0 0.0
    %714 = vmatpush2.msra.mxu0 0.0
    %715 = vmatprep.subr.mxu0 0.0
    %716 = vmatpush2.msra.mxu0 0.0
    %717 = vmatprep.subr.mxu0 0.0
    %718 = vmatpush2.msra.mxu0 0.0
    %719 = vmatprep.subr.mxu0 0.0
    %720 = vmatpush2.msra.mxu0 0.0
    %721 = vmatprep.subr.mxu0 0.0
    %722 = vmatpush2.msra.mxu0 0.0
    %723 = vmatprep.subr.mxu0 0.0
    %724 = vmatpush2.msra.mxu0 0.0
    %725 = vmatprep.subr.mxu0 0.0
    %726 = vmatpush2.msra.mxu0 0.0
    %727 = vmatprep.subr.mxu0 0.0
    %728 = vmatpush2.msra.mxu0 0.0
    %729 = vmatprep.mubr.f32.mxu0 0.0
    %730 = vmatmul.mubr.f32.gmra.mxu0 %v172
    %v731 = vpop.f32.mrf.mxu0
    %v732 = vadd.f32 0.0, %v731
    %v733 = vpop.f32.mrf.mxu0
    %v734 = vadd.f32 0.0, %v733
    %735 = vdwg.mxu0
    %736 = vmatprep.subr.mxu0 %v379
    %737 = vmatpush1.msra.mxu0 %v378
    %738 = vmatprep.subr.mxu0 %v366
    %739 = vmatpush1.msra.mxu0 %v365
    %740 = vmatprep.subr.mxu0 %v353
    %741 = vmatpush1.msra.mxu0 %v352
    %742 = vmatprep.subr.mxu0 %v340
    %743 = vmatpush1.msra.mxu0 %v339
    %744 = vmatprep.subr.mxu0 %v327
    %745 = vmatpush1.msra.mxu0 %v326
    %746 = vmatprep.subr.mxu0 %v314
    %747 = vmatpush1.msra.mxu0 %v313
    %748 = vmatprep.subr.mxu0 %v301
    %749 = vmatpush1.msra.mxu0 %v300
    %750 = vmatprep.subr.mxu0 %v288
    %751 = vmatpush1.msra.mxu0 %v287
    %752 = vmatprep.subr.mxu0 %v275
    %753 = vmatpush1.msra.mxu0 %v274
    %754 = vmatprep.subr.mxu0 %v262
    %755 = vmatpush1.msra.mxu0 %v261
    %756 = vmatprep.subr.mxu0 %v249
    %757 = vmatpush1.msra.mxu0 %v248
    %758 = vmatprep.subr.mxu0 %v236
    %759 = vmatpush1.msra.mxu0 %v235
    %760 = vmatprep.subr.mxu0 %v223
    %761 = vmatpush1.msra.mxu0 %v222
    %762 = vmatprep.subr.mxu0 %v210
    %763 = vmatpush1.msra.mxu0 %v209
    %764 = vmatprep.subr.mxu0 %v197
    %765 = vmatpush1.msra.mxu0 %v196
    %766 = vmatprep.subr.mxu0 %v184
    %767 = vmatpush1.msra.mxu0 %v183
    %768 = vmatprep.subr.mxu0 0.0
    %769 = vmatpush2.msra.mxu0 0.0
    %770 = vmatprep.subr.mxu0 0.0
    %771 = vmatpush2.msra.mxu0 0.0
    %772 = vmatprep.subr.mxu0 0.0
    %773 = vmatpush2.msra.mxu0 0.0
    %774 = vmatprep.subr.mxu0 0.0
    %775 = vmatpush2.msra.mxu0 0.0
    %776 = vmatprep.subr.mxu0 0.0
    %777 = vmatpush2.msra.mxu0 0.0
    %778 = vmatprep.subr.mxu0 0.0
    %779 = vmatpush2.msra.mxu0 0.0
    %780 = vmatprep.subr.mxu0 0.0
    %781 = vmatpush2.msra.mxu0 0.0
    %782 = vmatprep.subr.mxu0 0.0
    %783 = vmatpush2.msra.mxu0 0.0
    %784 = vmatprep.subr.mxu0 0.0
    %785 = vmatpush2.msra.mxu0 0.0
    %786 = vmatprep.subr.mxu0 0.0
    %787 = vmatpush2.msra.mxu0 0.0
    %788 = vmatprep.subr.mxu0 0.0
    %789 = vmatpush2.msra.mxu0 0.0
    %790 = vmatprep.subr.mxu0 0.0
    %791 = vmatpush2.msra.mxu0 0.0
    %792 = vmatprep.subr.mxu0 0.0
    %793 = vmatpush2.msra.mxu0 0.0
    %794 = vmatprep.subr.mxu0 0.0
    %795 = vmatpush2.msra.mxu0 0.0
    %796 = vmatprep.subr.mxu0 0.0
    %797 = vmatpush2.msra.mxu0 0.0
    %798 = vmatprep.subr.mxu0 0.0
    %799 = vmatpush2.msra.mxu0 0.0
    %800 = vmatprep.mubr.f32.mxu0 0.0
    %801 = vmatmul.mubr.f32.gmra.mxu0 %v172
    %v802 = vpop.f32.mrf.mxu0
    %v803 = vadd.f32 0.0, %v802
    %v804 = vpop.f32.mrf.mxu0
    %v805 = vadd.f32 0.0, %v804
    %806 = vdwg.mxu0
    %807 = vmatprep.subr.mxu0 0.0
    %808 = vmatpush1.msra.mxu0 %v380
    %809 = vmatprep.subr.mxu0 0.0
    %810 = vmatpush1.msra.mxu0 %v367
    %811 = vmatprep.subr.mxu0 0.0
    %812 = vmatpush1.msra.mxu0 %v354
    %813 = vmatprep.subr.mxu0 0.0
    %814 = vmatpush1.msra.mxu0 %v341
    %815 = vmatprep.subr.mxu0 0.0
    %816 = vmatpush1.msra.mxu0 %v328
    %817 = vmatprep.subr.mxu0 0.0
    %818 = vmatpush1.msra.mxu0 %v315
    %819 = vmatprep.subr.mxu0 0.0
    %820 = vmatpush1.msra.mxu0 %v302
    %821 = vmatprep.subr.mxu0 0.0
    %822 = vmatpush1.msra.mxu0 %v289
    %823 = vmatprep.subr.mxu0 0.0
    %824 = vmatpush1.msra.mxu0 %v276
    %825 = vmatprep.subr.mxu0 0.0
    %826 = vmatpush1.msra.mxu0 %v263
    %827 = vmatprep.subr.mxu0 0.0
    %828 = vmatpush1.msra.mxu0 %v250
    %829 = vmatprep.subr.mxu0 0.0
    %830 = vmatpush1.msra.mxu0 %v237
    %831 = vmatprep.subr.mxu0 0.0
    %832 = vmatpush1.msra.mxu0 %v224
    %833 = vmatprep.subr.mxu0 0.0
    %834 = vmatpush1.msra.mxu0 %v211
    %835 = vmatprep.subr.mxu0 0.0
    %836 = vmatpush1.msra.mxu0 %v198
    %837 = vmatprep.subr.mxu0 0.0
    %838 = vmatpush1.msra.mxu0 %v185
    %839 = vmatprep.subr.mxu0 0.0
    %840 = vmatpush2.msra.mxu0 0.0
    %841 = vmatprep.subr.mxu0 0.0
    %842 = vmatpush2.msra.mxu0 0.0
    %843 = vmatprep.subr.mxu0 0.0
    %844 = vmatpush2.msra.mxu0 0.0
    %845 = vmatprep.subr.mxu0 0.0
    %846 = vmatpush2.msra.mxu0 0.0
    %847 = vmatprep.subr.mxu0 0.0
    %848 = vmatpush2.msra.mxu0 0.0
    %849 = vmatprep.subr.mxu0 0.0
    %850 = vmatpush2.msra.mxu0 0.0
    %851 = vmatprep.subr.mxu0 0.0
    %852 = vmatpush2.msra.mxu0 0.0
    %853 = vmatprep.subr.mxu0 0.0
    %854 = vmatpush2.msra.mxu0 0.0
    %855 = vmatprep.subr.mxu0 0.0
    %856 = vmatpush2.msra.mxu0 0.0
    %857 = vmatprep.subr.mxu0 0.0
    %858 = vmatpush2.msra.mxu0 0.0
    %859 = vmatprep.subr.mxu0 0.0
    %860 = vmatpush2.msra.mxu0 0.0
    %861 = vmatprep.subr.mxu0 0.0
    %862 = vmatpush2.msra.mxu0 0.0
    %863 = vmatprep.subr.mxu0 0.0
    %864 = vmatpush2.msra.mxu0 0.0
    %865 = vmatprep.subr.mxu0 0.0
    %866 = vmatpush2.msra.mxu0 0.0
    %867 = vmatprep.subr.mxu0 0.0
    %868 = vmatpush2.msra.mxu0 0.0
    %869 = vmatprep.subr.mxu0 0.0
    %870 = vmatpush2.msra.mxu0 0.0
    %871 = vmatprep.mubr.f32.mxu0 0.0
    %872 = vmatmul.mubr.f32.gmra.mxu0 %v172
    %v873 = vpop.f32.mrf.mxu0
    %v874 = vadd.f32 0.0, %v873
    %v875 = vpop.f32.mrf.mxu0
    %876 = vdwg.mxu0
    %v877 = vlaneseq
    %v878 = vshrl.u32 %v877, 7
    %v879 = vrot.slane %v450, 7
    %vm880 = vcmp.ge.s32.totalorder %v878, 1
    %v881 = vsel %vm880, %v879, 0.0
    %v882 = vadd.f32 %v448, %v881
    %v883 = vrot.slane %v519, 6
    %vm884 = vcmp.ge.s32.totalorder %v878, 2
    %v885 = vsel %vm884, %v883, 0.0
    %v886 = vadd.f32 %v882, %v885
    %v887 = vrot.slane %v521, 5
    %vm888 = vcmp.ge.s32.totalorder %v878, 3
    %v889 = vsel %vm888, %v887, 0.0
    %v890 = vadd.f32 %v886, %v889
    %v891 = vrot.slane %v592, 1
    %vm892 = vcmp.lt.s32.totalorder %v878, 7
    %v893 = vsel %vm892, %v891, 0.0
    %v894 = vadd.f32 %v590, %v893
    %v895 = vrot.slane %v661, 2
    %vm896 = vcmp.lt.s32.totalorder %v878, 6
    %v897 = vsel %vm896, %v895, 0.0
    %v898 = vadd.f32 %v894, %v897
    %v899 = vrot.slane %v663, 3
    %vm900 = vcmp.lt.s32.totalorder %v878, 5
    %v901 = vsel %vm900, %v899, 0.0
    %v902 = vadd.f32 %v898, %v901
    %v903 = vrot.slane %v734, 6
    %v904 = vsel %vm884, %v903, 0.0
    %v905 = vadd.f32 %v732, %v904
    %v906 = vrot.slane %v803, 4
    %vm907 = vcmp.ge.s32.totalorder %v878, 4
    %v908 = vsel %vm907, %v906, 0.0
    %v909 = vadd.f32 %v905, %v908
    %v910 = vrot.slane %v805, 2
    %vm911 = vcmp.ge.s32.totalorder %v878, 6
    %v912 = vsel %vm911, %v910, 0.0
    %v913 = vadd.f32 %v909, %v912
    %v914 = vld [vmem:[%s4] sm:$0xf]
    %v916 = vlaneseq
    %v917 = vshrl.u32 %v916, 7
    %v918 = vsub.s32 0, %v917
    %v919 = vrot.slane %v914, %v918
    %v920 = vlaneseq
    %v921 = vshrl.u32 %v920, 7
    %v922 = vsub.s32 1, %v921
    %v923 = vrot.slane %v914, %v922
    %v924 = vlaneseq
    %v925 = vshrl.u32 %v924, 7
    %v926 = vsub.s32 2, %v925
    %v927 = vrot.slane %v914, %v926
    %v928 = vlaneseq
    %v929 = vshrl.u32 %v928, 7
    %v930 = vsub.s32 3, %v929
    %v931 = vrot.slane %v914, %v930
    %v936 = vadd.f32 %v890, %v919
    %v937 = vadd.f32 %v902, %v923
    %v938 = vadd.f32 %v913, %v927
    %v939 = vadd.f32 %v874, %v931
    %v940 = vmax.f32 %v936, 0.0
    %v941 = vmax.f32 %v937, 0.0
    %v942 = vmax.f32 %v938, 0.0
    %v943 = vmax.f32 %v939, 0.0
    %v944 = vld [vmem:[#allocation8] sm:$0xff]
    %v945 = vld [vmem:[#allocation8 + $0x8] sm:$0xff]
    %v946 = vld [vmem:[#allocation8 + $0x10] sm:$0xff]
    %v947 = vld [vmem:[#allocation8 + $0x18] sm:$0xff]
    %v948 = vld [vmem:[#allocation8 + $0x20] sm:$0xff]
    %v949 = vld [vmem:[#allocation8 + $0x28] sm:$0xff]
    %v950 = vld [vmem:[#allocation8 + $0x30] sm:$0xff]
    %v951 = vld [vmem:[#allocation8 + $0x38] sm:$0xff]
    %v952 = vld [vmem:[#allocation8 + $0x40] sm:$0xff]
    %v953 = vld [vmem:[#allocation8 + $0x48] sm:$0xff]
    %v954 = vld [vmem:[#allocation8 + $0x50] sm:$0xff]
    %v955 = vld [vmem:[#allocation8 + $0x58] sm:$0xff]
    %v956 = vld [vmem:[#allocation8 + $0x60] sm:$0xff]
    %v957 = vld [vmem:[#allocation8 + $0x68] sm:$0xff]
    %v958 = vld [vmem:[#allocation8 + $0x70] sm:$0xff]
    %v959 = vld [vmem:[#allocation8 + $0x78] sm:$0xff]
    %v960 = vld [vmem:[#allocation8 + $0x80] sm:$0xff]
    %v961 = vld [vmem:[#allocation8 + $0x88] sm:$0xff]
    %v962 = vld [vmem:[#allocation8 + $0x90] sm:$0xff]
    %v963 = vld [vmem:[#allocation8 + $0x98] sm:$0xff]
    %v964 = vld [vmem:[#allocation8 + $0xa0] sm:$0xff]
    %v965 = vld [vmem:[#allocation8 + $0xa8] sm:$0xff]
    %v966 = vld [vmem:[#allocation8 + $0xb0] sm:$0xff]
    %v967 = vld [vmem:[#allocation8 + $0xb8] sm:$0xff]
    %v968 = vld [vmem:[#allocation8 + $0xc0] sm:$0xff]
    %v969 = vld [vmem:[#allocation8 + $0xc8] sm:$0xff]
    %v970 = vld [vmem:[#allocation8 + $0xd0] sm:$0xff]
    %v971 = vld [vmem:[#allocation8 + $0xd8] sm:$0xff]
    %v972 = vld [vmem:[#allocation8 + $0xe0] sm:$0xff]
    %v973 = vld [vmem:[#allocation8 + $0xe8] sm:$0xff]
    %v974 = vld [vmem:[#allocation8 + $0xf0] sm:$0xff]
    %v975 = vld [vmem:[#allocation8 + $0xf8] sm:$0xff]
    %v976 = vld [vmem:[#allocation8 + $0x100] sm:$0xff]
    %v977 = vld [vmem:[#allocation8 + $0x108] sm:$0xff]
    %v978 = vld [vmem:[#allocation8 + $0x110] sm:$0xff]
    %v979 = vld [vmem:[#allocation8 + $0x118] sm:$0xff]
    %v980 = vld [vmem:[#allocation8 + $0x120] sm:$0xff]
    %v981 = vld [vmem:[#allocation8 + $0x128] sm:$0xff]
    %v982 = vld [vmem:[#allocation8 + $0x130] sm:$0xff]
    %v983 = vld [vmem:[#allocation8 + $0x138] sm:$0xff]
    %v984 = vld [vmem:[#allocation8 + $0x140] sm:$0xff]
    %v985 = vld [vmem:[#allocation8 + $0x148] sm:$0xff]
    %v986 = vld [vmem:[#allocation8 + $0x150] sm:$0xff]
    %v987 = vld [vmem:[#allocation8 + $0x158] sm:$0xff]
    %v988 = vld [vmem:[#allocation8 + $0x160] sm:$0xff]
    %v989 = vld [vmem:[#allocation8 + $0x168] sm:$0xff]
    %v990 = vld [vmem:[#allocation8 + $0x170] sm:$0xff]
    %v991 = vld [vmem:[#allocation8 + $0x178] sm:$0xff]
    %v992 = vld [vmem:[#allocation8 + $0x180] sm:$0xff]
    %v993 = vld [vmem:[#allocation8 + $0x188] sm:$0xff]
    %v994 = vld [vmem:[#allocation8 + $0x190] sm:$0xff]
    %v995 = vld [vmem:[#allocation8 + $0x198] sm:$0xff]
    %v996 = vld [vmem:[#allocation8 + $0x1a0] sm:$0xff]
    %v997 = vld [vmem:[#allocation8 + $0x1a8] sm:$0xff]
    %v998 = vld [vmem:[#allocation8 + $0x1b0] sm:$0xff]
    %v999 = vld [vmem:[#allocation8 + $0x1b8] sm:$0xff]
    %v1000 = vld [vmem:[#allocation8 + $0x1c0] sm:$0xff]
    %v1001 = vld [vmem:[#allocation8 + $0x1c8] sm:$0xff]
    %v1002 = vld [vmem:[#allocation8 + $0x1d0] sm:$0xff]
    %v1003 = vld [vmem:[#allocation8 + $0x1d8] sm:$0xff]
    %v1004 = vld [vmem:[#allocation8 + $0x1e0] sm:$0xff]
    %v1005 = vld [vmem:[#allocation8 + $0x1e8] sm:$0xff]
    %v1006 = vld [vmem:[#allocation8 + $0x1f0] sm:$0xff]
    %v1007 = vld [vmem:[#allocation8 + $0x1f8] sm:$0xff]
    %v1008 = vld [vmem:[%s6] sm:$0x1]
    %v1010 = vlaneseq
    %v1011 = vshrl.u32 %v1010, 7
    %v1012 = vsub.s32 0, %v1011
    %v1013 = vrot.slane %v1008, %v1012
    %1015 = vmatprep.subr.mxu0 0.0
    %1016 = vmatpush1.msra.mxu0 %v959
    %1017 = vmatprep.subr.mxu0 0.0
    %1018 = vmatpush1.msra.mxu0 %v958
    %1019 = vmatprep.subr.mxu0 0.0
    %1020 = vmatpush1.msra.mxu0 %v957
    %1021 = vmatprep.subr.mxu0 0.0
    %1022 = vmatpush1.msra.mxu0 %v956
    %1023 = vmatprep.subr.mxu0 0.0
    %1024 = vmatpush1.msra.mxu0 %v955
    %1025 = vmatprep.subr.mxu0 0.0
    %1026 = vmatpush1.msra.mxu0 %v954
    %1027 = vmatprep.subr.mxu0 0.0
    %1028 = vmatpush1.msra.mxu0 %v953
    %1029 = vmatprep.subr.mxu0 0.0
    %1030 = vmatpush1.msra.mxu0 %v952
    %1031 = vmatprep.subr.mxu0 0.0
    %1032 = vmatpush1.msra.mxu0 %v951
    %1033 = vmatprep.subr.mxu0 0.0
    %1034 = vmatpush1.msra.mxu0 %v950
    %1035 = vmatprep.subr.mxu0 0.0
    %1036 = vmatpush1.msra.mxu0 %v949
    %1037 = vmatprep.subr.mxu0 0.0
    %1038 = vmatpush1.msra.mxu0 %v948
    %1039 = vmatprep.subr.mxu0 0.0
    %1040 = vmatpush1.msra.mxu0 %v947
    %1041 = vmatprep.subr.mxu0 0.0
    %1042 = vmatpush1.msra.mxu0 %v946
    %1043 = vmatprep.subr.mxu0 0.0
    %1044 = vmatpush1.msra.mxu0 %v945
    %1045 = vmatprep.subr.mxu0 0.0
    %1046 = vmatpush1.msra.mxu0 %v944
    %1047 = vmatprep.subr.mxu0 0.0
    %1048 = vmatpush2.msra.mxu0 %v975
    %1049 = vmatprep.subr.mxu0 0.0
    %1050 = vmatpush2.msra.mxu0 %v974
    %1051 = vmatprep.subr.mxu0 0.0
    %1052 = vmatpush2.msra.mxu0 %v973
    %1053 = vmatprep.subr.mxu0 0.0
    %1054 = vmatpush2.msra.mxu0 %v972
    %1055 = vmatprep.subr.mxu0 0.0
    %1056 = vmatpush2.msra.mxu0 %v971
    %1057 = vmatprep.subr.mxu0 0.0
    %1058 = vmatpush2.msra.mxu0 %v970
    %1059 = vmatprep.subr.mxu0 0.0
    %1060 = vmatpush2.msra.mxu0 %v969
    %1061 = vmatprep.subr.mxu0 0.0
    %1062 = vmatpush2.msra.mxu0 %v968
    %1063 = vmatprep.subr.mxu0 0.0
    %1064 = vmatpush2.msra.mxu0 %v967
    %1065 = vmatprep.subr.mxu0 0.0
    %1066 = vmatpush2.msra.mxu0 %v966
    %1067 = vmatprep.subr.mxu0 0.0
    %1068 = vmatpush2.msra.mxu0 %v965
    %1069 = vmatprep.subr.mxu0 0.0
    %1070 = vmatpush2.msra.mxu0 %v964
    %1071 = vmatprep.subr.mxu0 0.0
    %1072 = vmatpush2.msra.mxu0 %v963
    %1073 = vmatprep.subr.mxu0 0.0
    %1074 = vmatpush2.msra.mxu0 %v962
    %1075 = vmatprep.subr.mxu0 0.0
    %1076 = vmatpush2.msra.mxu0 %v961
    %1077 = vmatprep.subr.mxu0 0.0
    %1078 = vmatpush2.msra.mxu0 %v960
    %1079 = vmatprep.mubr.f32.mxu0 %v941
    %1080 = vmatmul.mubr.f32.gmra.mxu0 %v940
    %v1081 = vpop.f32.mrf.mxu0
    %v1082 = vadd.f32 %v1013, %v1081
    %v1083 = vpop.f32.mrf.mxu0
    %1084 = vdwg.mxu0
    %1085 = vmatprep.subr.mxu0 0.0
    %1086 = vmatpush1.msra.mxu0 %v991
    %1087 = vmatprep.subr.mxu0 0.0
    %1088 = vmatpush1.msra.mxu0 %v990
    %1089 = vmatprep.subr.mxu0 0.0
    %1090 = vmatpush1.msra.mxu0 %v989
    %1091 = vmatprep.subr.mxu0 0.0
    %1092 = vmatpush1.msra.mxu0 %v988
    %1093 = vmatprep.subr.mxu0 0.0
    %1094 = vmatpush1.msra.mxu0 %v987
    %1095 = vmatprep.subr.mxu0 0.0
    %1096 = vmatpush1.msra.mxu0 %v986
    %1097 = vmatprep.subr.mxu0 0.0
    %1098 = vmatpush1.msra.mxu0 %v985
    %1099 = vmatprep.subr.mxu0 0.0
    %1100 = vmatpush1.msra.mxu0 %v984
    %1101 = vmatprep.subr.mxu0 0.0
    %1102 = vmatpush1.msra.mxu0 %v983
    %1103 = vmatprep.subr.mxu0 0.0
    %1104 = vmatpush1.msra.mxu0 %v982
    %1105 = vmatprep.subr.mxu0 0.0
    %1106 = vmatpush1.msra.mxu0 %v981
    %1107 = vmatprep.subr.mxu0 0.0
    %1108 = vmatpush1.msra.mxu0 %v980
    %1109 = vmatprep.subr.mxu0 0.0
    %1110 = vmatpush1.msra.mxu0 %v979
    %1111 = vmatprep.subr.mxu0 0.0
    %1112 = vmatpush1.msra.mxu0 %v978
    %1113 = vmatprep.subr.mxu0 0.0
    %1114 = vmatpush1.msra.mxu0 %v977
    %1115 = vmatprep.subr.mxu0 0.0
    %1116 = vmatpush1.msra.mxu0 %v976
    %1117 = vmatprep.subr.mxu0 0.0
    %1118 = vmatpush2.msra.mxu0 %v1007
    %1119 = vmatprep.subr.mxu0 0.0
    %1120 = vmatpush2.msra.mxu0 %v1006
    %1121 = vmatprep.subr.mxu0 0.0
    %1122 = vmatpush2.msra.mxu0 %v1005
    %1123 = vmatprep.subr.mxu0 0.0
    %1124 = vmatpush2.msra.mxu0 %v1004
    %1125 = vmatprep.subr.mxu0 0.0
    %1126 = vmatpush2.msra.mxu0 %v1003
    %1127 = vmatprep.subr.mxu0 0.0
    %1128 = vmatpush2.msra.mxu0 %v1002
    %1129 = vmatprep.subr.mxu0 0.0
    %1130 = vmatpush2.msra.mxu0 %v1001
    %1131 = vmatprep.subr.mxu0 0.0
    %1132 = vmatpush2.msra.mxu0 %v1000
    %1133 = vmatprep.subr.mxu0 0.0
    %1134 = vmatpush2.msra.mxu0 %v999
    %1135 = vmatprep.subr.mxu0 0.0
    %1136 = vmatpush2.msra.mxu0 %v998
    %1137 = vmatprep.subr.mxu0 0.0
    %1138 = vmatpush2.msra.mxu0 %v997
    %1139 = vmatprep.subr.mxu0 0.0
    %1140 = vmatpush2.msra.mxu0 %v996
    %1141 = vmatprep.subr.mxu0 0.0
    %1142 = vmatpush2.msra.mxu0 %v995
    %1143 = vmatprep.subr.mxu0 0.0
    %1144 = vmatpush2.msra.mxu0 %v994
    %1145 = vmatprep.subr.mxu0 0.0
    %1146 = vmatpush2.msra.mxu0 %v993
    %1147 = vmatprep.subr.mxu0 0.0
    %1148 = vmatpush2.msra.mxu0 %v992
    %1149 = vmatprep.mubr.f32.mxu0 %v943
    %1150 = vmatmul.mubr.f32.gmra.mxu0 %v942
    %v1151 = vpop.f32.mrf.mxu0
    %v1152 = vadd.f32 %v1082, %v1151
    %v1153 = vpop.f32.mrf.mxu0
    %1154 = vdwg.mxu0
    %1155 = vst [vmem:[#allocation10] sm:$0xff] %v1152
    // Predicated region
    $region46: #{tpu_custom_call.1} parent=1 // pred_check
      _
    $region47: #{tpu_custom_call.1} parent=1 // pred_check_branch
      %1157 = sbr.rel (0) target = $region49
    $region48: #{tpu_custom_call.1} parent=1 // pred_region
      %s1159 = ssub.s32 128, 128
      %1160 = vsyncadd [#allocation4], %s1159
      %s1162 = sshll.u32 [#allocation10], 4
      %s1163 = int_to_ptr.vmem [resolvable:$true] %s1162
      %1165 = dma.vmem_to_hbm [thread:$0]  %s1163, 128, %s7, [#allocation4]
    $region49: #{tpu_custom_call.1} parent=1 // pred_fallthru
      _
    // Predicated region
    $region50: #{tpu_custom_call.1} parent=1 // pred_check
      _
    $region51: #{tpu_custom_call.1} parent=1 // pred_check_branch
      %1167 = sbr.rel (0) target = $region53
    $region52: #{tpu_custom_call.1} parent=1 // pred_region
      %1168 = dma.done [#allocation4], 128
    $region53: #{tpu_custom_call.1} parent=1 // pred_fallthru
      _
    %1169 = vsyncpa [#allocation3], 1
    %1170 = vsyncpa [#allocation6], 1
    %1171 = vsyncpa [#allocation9], 1
    %1172 = vsyncpa [#allocation4], 1

</llo_original>
